<compile_context>
chip_gen: v6e
topology: v6e:2x2x1
jax: 0.10.0
libtpu: 0.0.40
codegen_flags: <defaults>
</compile_context>

<pallas_src>
import functools

import jax
import jax.numpy as jnp
import numpy as np
from jax import lax
from jax.experimental import pallas as pl
from jax.experimental.pallas import tpu as pltpu


# ----------------------------------------------------------------------------
# Host-side, ONE-TIME weight preparation.
# ----------------------------------------------------------------------------
def _build_conv_pool_matrices(w, b, h_in, w_in, c_in_eff, mp, mean=None, istd=None):
    """Fold Conv2d(valid, KxK) + MaxPool2d(mp) (+ optional input normalization) into
    mp*mp dense matrices.

    Returns (W4, b_vec, PH, PW):
      W4    : (mp*mp, c_in_eff*h_in*w_in, C*PH*PW) float32 such that
              x_flat @ W4[dh*mp+dw] == conv(norm(x))[c, mp*ph+dh, mp*pw+dw] (bias excluded)
      b_vec : (C*PH*PW,) per-channel conv bias (normalization folded), repeated over (ph,pw).
    """
    C, _, K, _ = w.shape
    OH, OW = h_in - K + 1, w_in - K + 1
    PH, PW = (OH - mp) // mp + 1, (OW - mp) // mp + 1          # floor-mode pooling
    scale = np.ones(c_in_eff, np.float32) if istd is None else np.asarray(istd, np.float32)

    W4 = np.zeros((mp * mp, c_in_eff * h_in * w_in, C * PH * PW), np.float32)
    kk = np.arange(K)
    for dh in range(mp):
        for dw in range(mp):
            d = dh * mp + dw
            for co in range(C):
                for ph in range(PH):
                    oh = mp * ph + dh
                    for pw in range(PW):
                        ow = mp * pw + dw
                        o_idx = (co * PH + ph) * PW + pw
                        for ci in range(c_in_eff):
                            rows = (ci * h_in + oh + kk)[:, None] * w_in + (ow + kk)[None, :]
                            W4[d, rows, o_idx] = w[co, ci] * scale[ci]

    b_eff = np.asarray(b, np.float32).copy()
    if mean is not None:
        # conv((x - m) * istd) = conv(x * istd) - sum_{ci,kh,kw} w[co,ci,kh,kw]*m[ci]*istd[ci]
        b_eff -= np.einsum("oikl,i->o", w[:, :c_in_eff].astype(np.float32),
                           np.asarray(mean, np.float32) * scale)
    b_vec = np.repeat(b_eff, PH * PW).astype(np.float32)
    return W4, b_vec, PH, PW


def prepare_fused_params(params, c_in, i_size, maxpool_kernel=2):
    """Precompute fused per-layer bf16 matrices + a packed f32 'tail' buffer per task."""
    C = params["channels"]
    mean = np.asarray(params["norm_mean"], np.float32)[:c_in]
    istd = np.asarray(params["norm_istd"], np.float32)[:c_in]

    layer_mats, layer_biases, layer_dims = [], [], []
    h_cur = w_cur = i_size
    ch_in = c_in
    for li, (w, b) in enumerate(params["convs"]):
        W4, b_vec, PH, PW = _build_conv_pool_matrices(
            np.asarray(w, np.float32), np.asarray(b, np.float32),
            h_cur, w_cur, ch_in, maxpool_kernel,
            mean=mean if li == 0 else None, istd=istd if li == 0 else None)
        # bf16 weights: MXU-native dtype, halves the dominant HBM->VMEM byte count.
        layer_mats.append(jnp.asarray(W4, dtype=jnp.bfloat16))
        layer_biases.append(b_vec)
        layer_dims.append(int(b_vec.size))
        h_cur, w_cur, ch_in = PH, PW, C

    feat_out = layer_dims[-1]
    bias_cols = int(sum(layer_dims))

    # Tail pack per task (f32, tiny): [layer-0 bias | layer-1 bias | ... | dec W^T | dec b]
    # laid out lane-wise; the decoder weight occupies rows [0:feat_out) of its column range.
    tail_packs, num_classes = [], []
    for wd, bd in params["decoders"]:
        wd = np.asarray(wd, np.float32)
        bd = np.asarray(bd, np.float32)
        nc = int(wd.shape[0])
        rows = max(1, feat_out)
        pack = np.zeros((rows, bias_cols + 2 * nc), np.float32)
        off = 0
        for bv in layer_biases:
            pack[0, off:off + bv.size] = bv
            off += bv.size
        pack[:feat_out, off:off + nc] = wd.T          # (F, num_classes)
        pack[0, off + nc:off + 2 * nc] = bd
        tail_packs.append(jnp.asarray(pack))
        num_classes.append(nc)

    return dict(layers=layer_mats, layer_dims=tuple(layer_dims),
                tail_packs=tail_packs, num_classes=num_classes,
                feat_in=c_in * i_size * i_size)


# ----------------------------------------------------------------------------
# Hardware queries (robust; never raise, conservative fallbacks).
# ----------------------------------------------------------------------------
def _num_tensorcores_per_device():
    try:
        info = pltpu.get_tpu_info()
        for attr in ("num_cores", "core_count", "num_tensorcores",
                     "cores_per_chip", "num_cores_per_chip", "tensor_cores_per_chip"):
            v = getattr(info, attr, None)
            if isinstance(v, (int, np.integer)) and 1 <= int(v) <= 16:
                return int(v)
    except Exception:
        pass
    try:
        v = getattr(jax.devices()[0], "num_cores", None)
        if isinstance(v, (int, np.integer)) and 1 <= int(v) <= 16:
            return int(v)
    except Exception:
        pass
    return 1


def _physical_vmem_bytes():
    try:
        info = pltpu.get_tpu_info()
        for attr in ("vmem_capacity_bytes", "vmem_bytes", "vmem_size_bytes"):
            v = getattr(info, attr, None)
            if isinstance(v, (int, np.integer)) and int(v) > 0:
                return int(v)
    except Exception:
        pass
    return 64 << 20   # v7x per-TensorCore VMEM: smallest across v5e/v6e/v7x


def _default_num_batch_blocks(n):
    """Split the batch across TensorCores only when each core gets enough rows to amortize
    the duplicated (per-core-private-VMEM) weight DMA; never split toy batches."""
    cores = _num_tensorcores_per_device()
    if cores < 2 or n < 2:
        return 1
    per_core = -(-n // cores)
    if per_core < 128:          # review: gate on per-core rows, ideally >= 128
        return 1
    return cores


# ----------------------------------------------------------------------------
# The fused kernel: whole forward for one batch block, everything resident in VMEM.
# ----------------------------------------------------------------------------
def _fused_cnn_kernel(*refs, layer_dims, num_classes):
    depth = len(layer_dims)
    x_ref = refs[0]
    w_refs = refs[1:1 + depth]           # per-layer folded conv+pool weights (bf16)
    tail_ref = refs[1 + depth]           # packed biases + decoder (f32)
    o_ref = refs[-1]

    tail = tail_ref[...]                 # (rows, cols) f32, tiny
    h = x_ref[...]                       # (nb, feat_in) f32, lane-dense
    col = 0
    for l in range(depth):
        w_ref = w_refs[l]
        out_f = layer_dims[l]
        hb = h.astype(w_ref.dtype)       # bf16 MXU operand; accumulation stays f32
        # conv + 2x2 max-pool: one MXU matmul per pool candidate, then elementwise max.
        acc = jnp.dot(hb, w_ref[0], preferred_element_type=jnp.float32)
        for d in range(1, w_ref.shape[0]):
            acc = jnp.maximum(acc, jnp.dot(hb, w_ref[d],
                                           preferred_element_type=jnp.float32))
        # Per-channel bias is constant over a pool window, so adding it after the max is
        # exact; ReLU follows the pool exactly as in the reference. Dropout = identity (eval).
        bias = tail[0:1, col:col + out_f]
        h = jnp.maximum(acc + bias, 0.0)            # f32 VPU elementwise (v5e-safe)
        col += out_f

    feat = layer_dims[-1]
    wdT = tail[0:feat, col:col + num_classes]       # (F, num_classes) f32
    bd = tail[0:1, col + num_classes:col + 2 * num_classes]
    o_ref[...] = jnp.dot(h, wdT, preferred_element_type=jnp.float32) + bd


def cnn_forward_fused(x, prep, task_id, num_batch_blocks=None):
    """x: (N, c_in, H, H) float32. Returns (N, num_classes) logits for task `task_id`."""
    N = x.shape[0]
    feat_in = prep["feat_in"]
    assert x.shape[1] * x.shape[2] * x.shape[3] == feat_in
    layer_dims = prep["layer_dims"]
    tail = prep["tail_packs"][task_id]
    num_classes = prep["num_classes"][task_id]

    if num_batch_blocks is None:
        num_batch_blocks = _default_num_batch_blocks(N)
    # Round each block up to full 8-sublane LHS tiles; zero-pad the batch (host-side, free).
    nb = -(-N // num_batch_blocks)
    nb = max(8, -(-nb // 8) * 8)
    n_pad = nb * num_batch_blocks

    x_flat = x.reshape(N, feat_in)                     # NCHW flat order (matches PyTorch)
    if n_pad != N:
        x_flat = jnp.concatenate(
            [x_flat, jnp.zeros((n_pad - N, feat_in), x_flat.dtype)], axis=0)
    x_blocks = x_flat.reshape(num_batch_blocks, nb, feat_in)

    flat_params = list(prep["layers"]) + [tail]
    in_specs = [pl.BlockSpec((None, nb, feat_in), lambda i: (i, 0, 0))]
    for W4 in prep["layers"]:
        in_specs.append(pl.BlockSpec(W4.shape, lambda i: (0, 0, 0)))   # VMEM MXU operand
    in_specs.append(pl.BlockSpec(tail.shape, lambda i: (0, 0)))
    # NOTE: layer-0's 196 output columns are intentionally NOT padded to 256 — bytes beat
    # lane tidiness while the W4[0] HBM transfer sets the wall-clock.

    # Explicit VMEM budget: (double-buffered) params + activation blocks + slack, capped
    # against the physical per-core VMEM (64 MiB on v7x).
    param_bytes = sum(int(a.size) * a.dtype.itemsize for a in flat_params)
    block_bytes = (nb * feat_in + nb * num_classes) * 4
    vmem_limit = int(min(2 * (param_bytes + block_bytes) + (16 << 20),
                         (_physical_vmem_bytes() * 3) // 4))

    out = pl.pallas_call(
        functools.partial(_fused_cnn_kernel, layer_dims=layer_dims,
                          num_classes=num_classes),
        out_shape=jax.ShapeDtypeStruct((num_batch_blocks, nb, num_classes), jnp.float32),
        grid=(num_batch_blocks,),
        in_specs=in_specs,
        out_specs=pl.BlockSpec((None, nb, num_classes), lambda i: (i, 0, 0)),
        compiler_params=pltpu.CompilerParams(
            dimension_semantics=("parallel",),
            vmem_limit_bytes=vmem_limit),
    )(x_blocks, *flat_params)
    return out.reshape(n_pad, num_classes)[:N]


# ----------------------------------------------------------------------------
# Pure-JAX reference for verification.
# ----------------------------------------------------------------------------
def reference_forward(x, params, task_id):
    C = params["channels"]
    c_in = x.shape[1]
    m = params["norm_mean"][:c_in].reshape(1, c_in, 1, 1)
    s = params["norm_istd"][:c_in].reshape(1, c_in, 1, 1)
    h = (x - m) * s
    h = jnp.pad(h, ((0, 0), (0, C - c_in), (0, 0), (0, 0)))
    for w, b in params["convs"]:
        h = lax.conv_general_dilated(h, w, (1, 1), "VALID",
                                     dimension_numbers=("NCHW", "OIHW", "NCHW"))
        h = h + b.reshape(1, -1, 1, 1)
        h = lax.reduce_window(h, -jnp.inf, lax.max, (1, 1, 2, 2), (1, 1, 2, 2), "VALID")
        h = jnp.maximum(h, 0.0)
    flat = h.reshape(h.shape[0], -1)
    wd, bd = params["decoders"][task_id]
    return flat @ wd.T + bd


if __name__ == "__main__":
    N, C_IN, C, H, DEPTH, K = 2, 3, 4, 16, 2, 3
    NUM_CLASSES, NUM_TASKS, TASK_ID = 10, 2, 0

    key = jax.random.PRNGKey(0)
    k_x, *k_p = jax.random.split(key, 2 + 2 * DEPTH + 2 * NUM_TASKS)
    x = jax.random.normal(k_x, (N, C_IN, H, H), jnp.float32)

    # deterministic parameter init (same shapes as the nn.Module's __init__)
    ki = 0
    convs = []
    for _ in range(DEPTH):
        w = 0.1 * jax.random.normal(k_p[ki], (C, C, K, K), jnp.float32); ki += 1
        b = 0.1 * jax.random.normal(k_p[ki], (C,), jnp.float32); ki += 1
        convs.append((w, b))

    out_h = H
    for _ in range(DEPTH):
        out_h = out_h - K + 1
        out_h = (out_h - 2) // 2 + 1
    F_dim = out_h * out_h * C

    decoders = []
    for _ in range(NUM_TASKS):
        wd = 0.1 * jax.random.normal(k_p[ki], (NUM_CLASSES, F_dim), jnp.float32); ki += 1
        bd = 0.1 * jax.random.normal(k_p[ki], (NUM_CLASSES,), jnp.float32); ki += 1
        decoders.append((wd, bd))

    mean3 = jnp.array([0.5079, 0.4872, 0.4415], jnp.float32)
    std3 = jnp.array([0.2676, 0.2567, 0.2765], jnp.float32)
    norm_mean = jnp.concatenate([mean3, jnp.zeros((C - C_IN,), jnp.float32)])
    norm_istd = jnp.concatenate([1.0 / std3, jnp.ones((C - C_IN,), jnp.float32)])

    params = dict(channels=C, convs=convs, decoders=decoders,
                  norm_mean=norm_mean, norm_istd=norm_istd)

    # one-time weight preparation (conv+pool folding, normalization folding, bf16 cast,
    # decoder transpose + constant packing)
    prep = prepare_fused_params(params, c_in=C_IN, i_size=H, maxpool_kernel=2)

    ref = reference_forward(x, params, TASK_ID)

    # bf16 weights + bf16 activation casts at the MXU dots => loosen tolerance vs f32.
    TOL = dict(rtol=5e-2, atol=5e-2)

    # default path: single block (the review's "don't split a tiny batch" rule)
    out = jax.block_until_ready(cnn_forward_fused(x, prep, TASK_ID))
    np.testing.assert_allclose(np.asarray(out), np.asarray(ref), **TOL)

    # correctness-only exercise of the multi-block "parallel" grid path (not a perf choice
    # at this batch size; the default gate would never pick it for N=2).
    out2 = jax.block_until_ready(cnn_forward_fused(x, prep, TASK_ID, num_batch_blocks=2))
    np.testing.assert_allclose(np.asarray(out2), np.asarray(ref), **TOL)

    print("KERNEL_OK")
</pallas_src>

<mosaic_0001>
module attributes {stable_mosaic.version = 11 : i64} {
  func.func @_fused_cnn_kernel(%arg0: i32, %arg1: memref<1x8x768xf32, #tpu.memory_space<vmem>>, %arg2: memref<4x768x196xbf16, #tpu.memory_space<vmem>>, %arg3: memref<4x196x16xbf16, #tpu.memory_space<vmem>>, %arg4: memref<16x232xf32, #tpu.memory_space<vmem>>, %arg5: memref<1x8x10xf32, #tpu.memory_space<vmem>>) attributes {dimension_semantics = [#tpu.dimension_semantics<parallel>], iteration_bounds = array<i64: 1>, scalar_prefetch = 0 : i64, scratch_operands = 0 : i64, tpu.core_type = #tpu.core_type<tc>, window_params = [{transform_indices = @transform_0, window_bounds = array<i64: 1, 8, 768>}, {pipeline_mode = #tpu.pipeline_mode<synchronous>, transform_indices = @transform_1, window_bounds = array<i64: 4, 768, 196>}, {pipeline_mode = #tpu.pipeline_mode<synchronous>, transform_indices = @transform_2, window_bounds = array<i64: 4, 196, 16>}, {pipeline_mode = #tpu.pipeline_mode<synchronous>, transform_indices = @transform_3, window_bounds = array<i64: 16, 232>}, {transform_indices = @transform_4, window_bounds = array<i64: 1, 8, 10>}]} {
    %c0 = arith.constant 0 : index
    %c0_0 = arith.constant 0 : index
    %0 = vector.load %arg4[%c0, %c0_0] : memref<16x232xf32, #tpu.memory_space<vmem>>, vector<16x232xf32>
    %c0_1 = arith.constant 0 : index
    %c0_2 = arith.constant 0 : index
    %c0_3 = arith.constant 0 : index
    %1 = vector.load %arg1[%c0_1, %c0_2, %c0_3] : memref<1x8x768xf32, #tpu.memory_space<vmem>>, vector<1x8x768xf32>
    %2 = vector.shape_cast %1 : vector<1x8x768xf32> to vector<8x768xf32>
    %3 = arith.truncf %2 : vector<8x768xf32> to vector<8x768xbf16>
    %c0_4 = arith.constant 0 : index
    %c0_5 = arith.constant 0 : index
    %c0_6 = arith.constant 0 : index
    %4 = vector.load %arg2[%c0_4, %c0_5, %c0_6] : memref<4x768x196xbf16, #tpu.memory_space<vmem>>, vector<1x768x196xbf16>
    %5 = vector.shape_cast %4 : vector<1x768x196xbf16> to vector<768x196xbf16>
    %cst = arith.constant dense<0.000000e+00> : vector<8x196xf32>
    %6 = tpu.matmul %3, %5, %cst {dimension_numbers = #tpu.dot_dimension_numbers<[1], [0], [0], [1], [0, 0, 1, 1], [], []>} : vector<8x768xbf16>, vector<768x196xbf16>, vector<8x196xf32> -> vector<8x196xf32>
    %c1 = arith.constant 1 : index
    %c0_7 = arith.constant 0 : index
    %c0_8 = arith.constant 0 : index
    %7 = vector.load %arg2[%c1, %c0_7, %c0_8] : memref<4x768x196xbf16, #tpu.memory_space<vmem>>, vector<1x768x196xbf16>
    %8 = vector.shape_cast %7 : vector<1x768x196xbf16> to vector<768x196xbf16>
    %cst_9 = arith.constant dense<0.000000e+00> : vector<8x196xf32>
    %9 = tpu.matmul %3, %8, %cst_9 {dimension_numbers = #tpu.dot_dimension_numbers<[1], [0], [0], [1], [0, 0, 1, 1], [], []>} : vector<8x768xbf16>, vector<768x196xbf16>, vector<8x196xf32> -> vector<8x196xf32>
    %10 = arith.maximumf %6, %9 : vector<8x196xf32>
    %c2 = arith.constant 2 : index
    %c0_10 = arith.constant 0 : index
    %c0_11 = arith.constant 0 : index
    %11 = vector.load %arg2[%c2, %c0_10, %c0_11] : memref<4x768x196xbf16, #tpu.memory_space<vmem>>, vector<1x768x196xbf16>
    %12 = vector.shape_cast %11 : vector<1x768x196xbf16> to vector<768x196xbf16>
    %cst_12 = arith.constant dense<0.000000e+00> : vector<8x196xf32>
    %13 = tpu.matmul %3, %12, %cst_12 {dimension_numbers = #tpu.dot_dimension_numbers<[1], [0], [0], [1], [0, 0, 1, 1], [], []>} : vector<8x768xbf16>, vector<768x196xbf16>, vector<8x196xf32> -> vector<8x196xf32>
    %14 = arith.maximumf %10, %13 : vector<8x196xf32>
    %c3 = arith.constant 3 : index
    %c0_13 = arith.constant 0 : index
    %c0_14 = arith.constant 0 : index
    %15 = vector.load %arg2[%c3, %c0_13, %c0_14] : memref<4x768x196xbf16, #tpu.memory_space<vmem>>, vector<1x768x196xbf16>
    %16 = vector.shape_cast %15 : vector<1x768x196xbf16> to vector<768x196xbf16>
    %cst_15 = arith.constant dense<0.000000e+00> : vector<8x196xf32>
    %17 = tpu.matmul %3, %16, %cst_15 {dimension_numbers = #tpu.dot_dimension_numbers<[1], [0], [0], [1], [0, 0, 1, 1], [], []>} : vector<8x768xbf16>, vector<768x196xbf16>, vector<8x196xf32> -> vector<8x196xf32>
    %18 = arith.maximumf %14, %17 : vector<8x196xf32>
    %19 = vector.extract_strided_slice %0 {offsets = [0, 0], sizes = [1, 196], strides = [1, 1]} : vector<16x232xf32> to vector<1x196xf32>
    %20 = vector.broadcast %19 : vector<1x196xf32> to vector<8x196xf32>
    %21 = arith.addf %18, %20 : vector<8x196xf32>
    %cst_16 = arith.constant 0.000000e+00 : f32
    %22 = vector.broadcast %cst_16 : f32 to vector<8x196xf32>
    %23 = arith.maximumf %21, %22 : vector<8x196xf32>
    %24 = arith.truncf %23 : vector<8x196xf32> to vector<8x196xbf16>
    %c0_17 = arith.constant 0 : index
    %c0_18 = arith.constant 0 : index
    %c0_19 = arith.constant 0 : index
    %25 = vector.load %arg3[%c0_17, %c0_18, %c0_19] : memref<4x196x16xbf16, #tpu.memory_space<vmem>>, vector<1x196x16xbf16>
    %26 = vector.shape_cast %25 : vector<1x196x16xbf16> to vector<196x16xbf16>
    %cst_20 = arith.constant dense<0.000000e+00> : vector<8x16xf32>
    %27 = tpu.matmul %24, %26, %cst_20 {dimension_numbers = #tpu.dot_dimension_numbers<[1], [0], [0], [1], [0, 0, 1, 1], [], []>} : vector<8x196xbf16>, vector<196x16xbf16>, vector<8x16xf32> -> vector<8x16xf32>
    %c1_21 = arith.constant 1 : index
    %c0_22 = arith.constant 0 : index
    %c0_23 = arith.constant 0 : index
    %28 = vector.load %arg3[%c1_21, %c0_22, %c0_23] : memref<4x196x16xbf16, #tpu.memory_space<vmem>>, vector<1x196x16xbf16>
    %29 = vector.shape_cast %28 : vector<1x196x16xbf16> to vector<196x16xbf16>
    %cst_24 = arith.constant dense<0.000000e+00> : vector<8x16xf32>
    %30 = tpu.matmul %24, %29, %cst_24 {dimension_numbers = #tpu.dot_dimension_numbers<[1], [0], [0], [1], [0, 0, 1, 1], [], []>} : vector<8x196xbf16>, vector<196x16xbf16>, vector<8x16xf32> -> vector<8x16xf32>
    %31 = arith.maximumf %27, %30 : vector<8x16xf32>
    %c2_25 = arith.constant 2 : index
    %c0_26 = arith.constant 0 : index
    %c0_27 = arith.constant 0 : index
    %32 = vector.load %arg3[%c2_25, %c0_26, %c0_27] : memref<4x196x16xbf16, #tpu.memory_space<vmem>>, vector<1x196x16xbf16>
    %33 = vector.shape_cast %32 : vector<1x196x16xbf16> to vector<196x16xbf16>
    %cst_28 = arith.constant dense<0.000000e+00> : vector<8x16xf32>
    %34 = tpu.matmul %24, %33, %cst_28 {dimension_numbers = #tpu.dot_dimension_numbers<[1], [0], [0], [1], [0, 0, 1, 1], [], []>} : vector<8x196xbf16>, vector<196x16xbf16>, vector<8x16xf32> -> vector<8x16xf32>
    %35 = arith.maximumf %31, %34 : vector<8x16xf32>
    %c3_29 = arith.constant 3 : index
    %c0_30 = arith.constant 0 : index
    %c0_31 = arith.constant 0 : index
    %36 = vector.load %arg3[%c3_29, %c0_30, %c0_31] : memref<4x196x16xbf16, #tpu.memory_space<vmem>>, vector<1x196x16xbf16>
    %37 = vector.shape_cast %36 : vector<1x196x16xbf16> to vector<196x16xbf16>
    %cst_32 = arith.constant dense<0.000000e+00> : vector<8x16xf32>
    %38 = tpu.matmul %24, %37, %cst_32 {dimension_numbers = #tpu.dot_dimension_numbers<[1], [0], [0], [1], [0, 0, 1, 1], [], []>} : vector<8x196xbf16>, vector<196x16xbf16>, vector<8x16xf32> -> vector<8x16xf32>
    %39 = arith.maximumf %35, %38 : vector<8x16xf32>
    %40 = vector.extract_strided_slice %0 {offsets = [0, 196], sizes = [1, 16], strides = [1, 1]} : vector<16x232xf32> to vector<1x16xf32>
    %41 = vector.broadcast %40 : vector<1x16xf32> to vector<8x16xf32>
    %42 = arith.addf %39, %41 : vector<8x16xf32>
    %cst_33 = arith.constant 0.000000e+00 : f32
    %43 = vector.broadcast %cst_33 : f32 to vector<8x16xf32>
    %44 = arith.maximumf %42, %43 : vector<8x16xf32>
    %45 = vector.extract_strided_slice %0 {offsets = [0, 212], sizes = [16, 10], strides = [1, 1]} : vector<16x232xf32> to vector<16x10xf32>
    %46 = vector.extract_strided_slice %0 {offsets = [0, 222], sizes = [1, 10], strides = [1, 1]} : vector<16x232xf32> to vector<1x10xf32>
    %cst_34 = arith.constant dense<0.000000e+00> : vector<8x10xf32>
    %47 = tpu.matmul %44, %45, %cst_34 {dimension_numbers = #tpu.dot_dimension_numbers<[1], [0], [0], [1], [0, 0, 1, 1], [], []>} : vector<8x16xf32>, vector<16x10xf32>, vector<8x10xf32> -> vector<8x10xf32>
    %48 = vector.broadcast %46 : vector<1x10xf32> to vector<8x10xf32>
    %49 = arith.addf %47, %48 : vector<8x10xf32>
    %c0_35 = arith.constant 0 : index
    %c0_36 = arith.constant 0 : index
    %c0_37 = arith.constant 0 : index
    %50 = vector.load %arg5[%c0_35, %c0_36, %c0_37] : memref<1x8x10xf32, #tpu.memory_space<vmem>>, vector<1x8x10xf32>
    %51 = vector.shape_cast %50 : vector<1x8x10xf32> to vector<8x10xf32>
    %52 = vector.shape_cast %49 : vector<8x10xf32> to vector<1x8x10xf32>
    tpu.vector_store %arg5[%c0_35, %c0_36, %c0_37], %52 {strides = array<i32>} : memref<1x8x10xf32, #tpu.memory_space<vmem>>, vector<1x8x10xf32>,
    return
  }
  func.func @transform_0(%arg0: i32) -> (i32, i32, i32) {
    %c0_i32 = arith.constant 0 : i32
    %c0_i32_0 = arith.constant 0 : i32
    %c0_i32_1 = arith.constant 0 : i32
    return %arg0, %c0_i32, %c0_i32_0 : i32, i32, i32
  }
  func.func @transform_1(%arg0: i32) -> (i32, i32, i32) {
    %c0_i32 = arith.constant 0 : i32
    %c0_i32_0 = arith.constant 0 : i32
    %c0_i32_1 = arith.constant 0 : i32
    %c0_i32_2 = arith.constant 0 : i32
    return %c0_i32, %c0_i32_0, %c0_i32_1 : i32, i32, i32
  }
  func.func @transform_2(%arg0: i32) -> (i32, i32, i32) {
    %c0_i32 = arith.constant 0 : i32
    %c0_i32_0 = arith.constant 0 : i32
    %c0_i32_1 = arith.constant 0 : i32
    %c0_i32_2 = arith.constant 0 : i32
    return %c0_i32, %c0_i32_0, %c0_i32_1 : i32, i32, i32
  }
  func.func @transform_3(%arg0: i32) -> (i32, i32) {
    %c0_i32 = arith.constant 0 : i32
    %c0_i32_0 = arith.constant 0 : i32
    %c0_i32_1 = arith.constant 0 : i32
    return %c0_i32, %c0_i32_0 : i32, i32
  }
  func.func @transform_4(%arg0: i32) -> (i32, i32, i32) {
    %c0_i32 = arith.constant 0 : i32
    %c0_i32_0 = arith.constant 0 : i32
    %c0_i32_1 = arith.constant 0 : i32
    return %arg0, %c0_i32, %c0_i32_0 : i32, i32, i32
  }
}

</mosaic_0001>

<llo_original>
// kernel: tpu_custom_call.1
$region0: #{tpu_custom_call.1}
  #allocation0 [shape = 'u32[]', space=smem, size = 0x4, offset = 0x4, fixed_abs, tag = 'smem constant byte address 0x4 - core index']
  #allocation1 [shape = 'u32[144,128]{1,0:T(1,128)}', space=vmem, size = 0x12000, scoped, tag = 'internal scratch']
  %s0 = inlined_call_operand.vmem [shape: f32[1,8,768], index: 0, kind: input, shape index: {}]
  %s1 = inlined_call_operand.vmem [shape: bf16[4,768,196], index: 1, kind: input, shape index: {}]
  %s2 = inlined_call_operand.vmem [shape: bf16[4,196,16], index: 2, kind: input, shape index: {}]
  %s3 = inlined_call_operand.vmem [shape: f32[16,232], index: 3, kind: input, shape index: {}]
  %s4 = inlined_call_operand.hbm [shape: f32[1,8,10], index: 4, kind: output, shape index: {}]
  %s5 = sld [smem:[#allocation0]]
  $region26: #{tpu_custom_call.1} parent=0
    _
  %s7 = ssub.s32 1, %s5
  %s8 = scalar_select 0, %s7, %s5
  $region1: #{tpu_custom_call.1} parent=0
    #allocation2 [shape = 'u8[4096]{0}', space=vmem, size = 0x1000, scoped, tag = 'output window, operand 0, single buffered']
    #allocation3 [shape = 's32[1]{0}', space=sflag, size = 0x4, scoped, tag = 'scoped memory for tpu_custom_call.1']
    %9 = vsyncpa [#allocation3], 0
    // Predicated region
    $region2: #{tpu_custom_call.1} parent=1 // pred_check
      _
    $region3: #{tpu_custom_call.1} parent=1 // pred_check_branch
      %11 = sbr.rel (0) target = $region5
    $region4: #{tpu_custom_call.1} parent=1 // pred_region
      _
    $region5: #{tpu_custom_call.1} parent=1 // pred_fallthru
      _
    // Predicated region
    $region6: #{tpu_custom_call.1} parent=1 // pred_check
      _
    $region7: #{tpu_custom_call.1} parent=1 // pred_check_branch
      %13 = sbr.rel (0) target = $region9
    $region8: #{tpu_custom_call.1} parent=1 // pred_region
      _
    $region9: #{tpu_custom_call.1} parent=1 // pred_fallthru
      _
    // Predicated region
    $region10: #{tpu_custom_call.1} parent=1 // pred_check
      _
    $region11: #{tpu_custom_call.1} parent=1 // pred_check_branch
      %15 = sbr.rel (0) target = $region13
    $region12: #{tpu_custom_call.1} parent=1 // pred_region
      _
    $region13: #{tpu_custom_call.1} parent=1 // pred_fallthru
      _
    // Predicated region
    $region14: #{tpu_custom_call.1} parent=1 // pred_check
      _
    $region15: #{tpu_custom_call.1} parent=1 // pred_check_branch
      %17 = sbr.rel (0) target = $region17
    $region16: #{tpu_custom_call.1} parent=1 // pred_region
      _
    $region17: #{tpu_custom_call.1} parent=1 // pred_fallthru
      _
    %v19 = vld [vmem:[%s3] sm:$0xff]
    %v20 = vld [vmem:[%s3 + $0x8] sm:$0xff]
    %v21 = vld [vmem:[%s3 + $0x18] sm:$0xff]
    %v22 = vld [vmem:[%s0] sm:$0xff]
    %v23 = vld [vmem:[%s0 + $0x8] sm:$0xff]
    %v24 = vld [vmem:[%s0 + $0x10] sm:$0xff]
    %v25 = vld [vmem:[%s0 + $0x18] sm:$0xff]
    %v26 = vld [vmem:[%s0 + $0x20] sm:$0xff]
    %v27 = vld [vmem:[%s0 + $0x28] sm:$0xff]
    %v28 = vpack.c.bf16 %v22, %v22
    %v29 = vpack.c.bf16 %v23, %v23
    %v30 = vpack.c.bf16 %v24, %v24
    %v31 = vpack.c.bf16 %v25, %v25
    %v32 = vpack.c.bf16 %v26, %v26
    %v33 = vpack.c.bf16 %v27, %v27
    %v34 = vld [vmem:[%s1] sm:$0xff]
    %v35 = vld [vmem:[%s1 + $0x8] sm:$0xff]
    %v36 = vld [vmem:[%s1 + $0x10] sm:$0xff]
    %v37 = vld [vmem:[%s1 + $0x18] sm:$0xff]
    %v38 = vld [vmem:[%s1 + $0x20] sm:$0xff]
    %v39 = vld [vmem:[%s1 + $0x28] sm:$0xff]
    %v40 = vld [vmem:[%s1 + $0x30] sm:$0xff]
    %v41 = vld [vmem:[%s1 + $0x38] sm:$0xff]
    %v42 = vld [vmem:[%s1 + $0x40] sm:$0xff]
    %v43 = vld [vmem:[%s1 + $0x48] sm:$0xff]
    %v44 = vld [vmem:[%s1 + $0x50] sm:$0xff]
    %v45 = vld [vmem:[%s1 + $0x58] sm:$0xff]
    %v46 = vld [vmem:[%s1 + $0x60] sm:$0xff]
    %v47 = vld [vmem:[%s1 + $0x68] sm:$0xff]
    %v48 = vld [vmem:[%s1 + $0x70] sm:$0xff]
    %v49 = vld [vmem:[%s1 + $0x78] sm:$0xff]
    %v50 = vld [vmem:[%s1 + $0x80] sm:$0xff]
    %v51 = vld [vmem:[%s1 + $0x88] sm:$0xff]
    %v52 = vld [vmem:[%s1 + $0x90] sm:$0xff]
    %v53 = vld [vmem:[%s1 + $0x98] sm:$0xff]
    %v54 = vld [vmem:[%s1 + $0xa0] sm:$0xff]
    %v55 = vld [vmem:[%s1 + $0xa8] sm:$0xff]
    %v56 = vld [vmem:[%s1 + $0xb0] sm:$0xff]
    %v57 = vld [vmem:[%s1 + $0xb8] sm:$0xff]
    %v58 = vld [vmem:[%s1 + $0xc0] sm:$0xff]
    %v59 = vld [vmem:[%s1 + $0xc8] sm:$0xff]
    %v60 = vld [vmem:[%s1 + $0xd0] sm:$0xff]
    %v61 = vld [vmem:[%s1 + $0xd8] sm:$0xff]
    %v62 = vld [vmem:[%s1 + $0xe0] sm:$0xff]
    %v63 = vld [vmem:[%s1 + $0xe8] sm:$0xff]
    %v64 = vld [vmem:[%s1 + $0xf0] sm:$0xff]
    %v65 = vld [vmem:[%s1 + $0xf8] sm:$0xff]
    %v66 = vld [vmem:[%s1 + $0x100] sm:$0xff]
    %v67 = vld [vmem:[%s1 + $0x108] sm:$0xff]
    %v68 = vld [vmem:[%s1 + $0x110] sm:$0xff]
    %v69 = vld [vmem:[%s1 + $0x118] sm:$0xff]
    %v70 = vld [vmem:[%s1 + $0x120] sm:$0xff]
    %v71 = vld [vmem:[%s1 + $0x128] sm:$0xff]
    %v72 = vld [vmem:[%s1 + $0x130] sm:$0xff]
    %v73 = vld [vmem:[%s1 + $0x138] sm:$0xff]
    %v74 = vld [vmem:[%s1 + $0x140] sm:$0xff]
    %v75 = vld [vmem:[%s1 + $0x148] sm:$0xff]
    %v76 = vld [vmem:[%s1 + $0x150] sm:$0xff]
    %v77 = vld [vmem:[%s1 + $0x158] sm:$0xff]
    %v78 = vld [vmem:[%s1 + $0x160] sm:$0xff]
    %v79 = vld [vmem:[%s1 + $0x168] sm:$0xff]
    %v80 = vld [vmem:[%s1 + $0x170] sm:$0xff]
    %v81 = vld [vmem:[%s1 + $0x178] sm:$0xff]
    %v82 = vld [vmem:[%s1 + $0x180] sm:$0xff]
    %v83 = vld [vmem:[%s1 + $0x188] sm:$0xff]
    %v84 = vld [vmem:[%s1 + $0x190] sm:$0xff]
    %v85 = vld [vmem:[%s1 + $0x198] sm:$0xff]
    %v86 = vld [vmem:[%s1 + $0x1a0] sm:$0xff]
    %v87 = vld [vmem:[%s1 + $0x1a8] sm:$0xff]
    %v88 = vld [vmem:[%s1 + $0x1b0] sm:$0xff]
    %v89 = vld [vmem:[%s1 + $0x1b8] sm:$0xff]
    %v90 = vld [vmem:[%s1 + $0x1c0] sm:$0xff]
    %v91 = vld [vmem:[%s1 + $0x1c8] sm:$0xff]
    %v92 = vld [vmem:[%s1 + $0x1d0] sm:$0xff]
    %v93 = vld [vmem:[%s1 + $0x1d8] sm:$0xff]
    %v94 = vld [vmem:[%s1 + $0x1e0] sm:$0xff]
    %v95 = vld [vmem:[%s1 + $0x1e8] sm:$0xff]
    %v96 = vld [vmem:[%s1 + $0x1f0] sm:$0xff]
    %v97 = vld [vmem:[%s1 + $0x1f8] sm:$0xff]
    %v98 = vld [vmem:[%s1 + $0x200] sm:$0xff]
    %v99 = vld [vmem:[%s1 + $0x208] sm:$0xff]
    %v100 = vld [vmem:[%s1 + $0x210] sm:$0xff]
    %v101 = vld [vmem:[%s1 + $0x218] sm:$0xff]
    %v102 = vld [vmem:[%s1 + $0x220] sm:$0xff]
    %v103 = vld [vmem:[%s1 + $0x228] sm:$0xff]
    %v104 = vld [vmem:[%s1 + $0x230] sm:$0xff]
    %v105 = vld [vmem:[%s1 + $0x238] sm:$0xff]
    %v106 = vld [vmem:[%s1 + $0x240] sm:$0xff]
    %v107 = vld [vmem:[%s1 + $0x248] sm:$0xff]
    %v108 = vld [vmem:[%s1 + $0x250] sm:$0xff]
    %v109 = vld [vmem:[%s1 + $0x258] sm:$0xff]
    %v110 = vld [vmem:[%s1 + $0x260] sm:$0xff]
    %v111 = vld [vmem:[%s1 + $0x268] sm:$0xff]
    %v112 = vld [vmem:[%s1 + $0x270] sm:$0xff]
    %v113 = vld [vmem:[%s1 + $0x278] sm:$0xff]
    %v114 = vld [vmem:[%s1 + $0x280] sm:$0xff]
    %v115 = vld [vmem:[%s1 + $0x288] sm:$0xff]
    %v116 = vld [vmem:[%s1 + $0x290] sm:$0xff]
    %v117 = vld [vmem:[%s1 + $0x298] sm:$0xff]
    %v118 = vld [vmem:[%s1 + $0x2a0] sm:$0xff]
    %v119 = vld [vmem:[%s1 + $0x2a8] sm:$0xff]
    %v120 = vld [vmem:[%s1 + $0x2b0] sm:$0xff]
    %v121 = vld [vmem:[%s1 + $0x2b8] sm:$0xff]
    %v122 = vld [vmem:[%s1 + $0x2c0] sm:$0xff]
    %v123 = vld [vmem:[%s1 + $0x2c8] sm:$0xff]
    %v124 = vld [vmem:[%s1 + $0x2d0] sm:$0xff]
    %v125 = vld [vmem:[%s1 + $0x2d8] sm:$0xff]
    %v126 = vld [vmem:[%s1 + $0x2e0] sm:$0xff]
    %v127 = vld [vmem:[%s1 + $0x2e8] sm:$0xff]
    %v128 = vld [vmem:[%s1 + $0x2f0] sm:$0xff]
    %v129 = vld [vmem:[%s1 + $0x2f8] sm:$0xff]
    %v226 = vunpack.c.l.b16 %v34
    %v227 = vunpack.c.h.b16 %v34
    %v228 = vunpack.c.l.b16 %v35
    %v229 = vunpack.c.h.b16 %v35
    %v230 = vunpack.c.l.b16 %v36
    %v231 = vunpack.c.h.b16 %v36
    %v232 = vunpack.c.l.b16 %v37
    %v233 = vunpack.c.h.b16 %v37
    %v234 = vunpack.c.l.b16 %v38
    %v235 = vunpack.c.h.b16 %v38
    %v236 = vunpack.c.l.b16 %v39
    %v237 = vunpack.c.h.b16 %v39
    %v238 = vunpack.c.l.b16 %v40
    %v239 = vunpack.c.h.b16 %v40
    %v240 = vunpack.c.l.b16 %v41
    %v241 = vunpack.c.h.b16 %v41
    %v242 = vunpack.c.l.b16 %v42
    %v243 = vunpack.c.h.b16 %v42
    %v244 = vunpack.c.l.b16 %v43
    %v245 = vunpack.c.h.b16 %v43
    %v246 = vunpack.c.l.b16 %v44
    %v247 = vunpack.c.h.b16 %v44
    %v248 = vunpack.c.l.b16 %v45
    %v249 = vunpack.c.h.b16 %v45
    %v250 = vunpack.c.l.b16 %v46
    %v251 = vunpack.c.h.b16 %v46
    %v252 = vunpack.c.l.b16 %v47
    %v253 = vunpack.c.h.b16 %v47
    %v254 = vunpack.c.l.b16 %v48
    %v255 = vunpack.c.h.b16 %v48
    %v256 = vunpack.c.l.b16 %v49
    %v257 = vunpack.c.h.b16 %v49
    %v258 = vunpack.c.l.b16 %v50
    %v259 = vunpack.c.h.b16 %v50
    %v260 = vunpack.c.l.b16 %v51
    %v261 = vunpack.c.h.b16 %v51
    %v262 = vunpack.c.l.b16 %v52
    %v263 = vunpack.c.h.b16 %v52
    %v264 = vunpack.c.l.b16 %v53
    %v265 = vunpack.c.h.b16 %v53
    %v266 = vunpack.c.l.b16 %v54
    %v267 = vunpack.c.h.b16 %v54
    %v268 = vunpack.c.l.b16 %v55
    %v269 = vunpack.c.h.b16 %v55
    %v270 = vunpack.c.l.b16 %v56
    %v271 = vunpack.c.h.b16 %v56
    %v272 = vunpack.c.l.b16 %v57
    %v273 = vunpack.c.h.b16 %v57
    %v274 = vunpack.c.l.b16 %v58
    %v275 = vunpack.c.h.b16 %v58
    %v276 = vunpack.c.l.b16 %v59
    %v277 = vunpack.c.h.b16 %v59
    %v278 = vunpack.c.l.b16 %v60
    %v279 = vunpack.c.h.b16 %v60
    %v280 = vunpack.c.l.b16 %v61
    %v281 = vunpack.c.h.b16 %v61
    %v282 = vunpack.c.l.b16 %v62
    %v283 = vunpack.c.h.b16 %v62
    %v284 = vunpack.c.l.b16 %v63
    %v285 = vunpack.c.h.b16 %v63
    %v286 = vunpack.c.l.b16 %v64
    %v287 = vunpack.c.h.b16 %v64
    %v288 = vunpack.c.l.b16 %v65
    %v289 = vunpack.c.h.b16 %v65
    %v290 = vunpack.c.l.b16 %v66
    %v291 = vunpack.c.h.b16 %v66
    %v292 = vunpack.c.l.b16 %v67
    %v293 = vunpack.c.h.b16 %v67
    %v294 = vunpack.c.l.b16 %v68
    %v295 = vunpack.c.h.b16 %v68
    %v296 = vunpack.c.l.b16 %v69
    %v297 = vunpack.c.h.b16 %v69
    %v298 = vunpack.c.l.b16 %v70
    %v299 = vunpack.c.h.b16 %v70
    %v300 = vunpack.c.l.b16 %v71
    %v301 = vunpack.c.h.b16 %v71
    %v302 = vunpack.c.l.b16 %v72
    %v303 = vunpack.c.h.b16 %v72
    %v304 = vunpack.c.l.b16 %v73
    %v305 = vunpack.c.h.b16 %v73
    %v306 = vunpack.c.l.b16 %v74
    %v307 = vunpack.c.h.b16 %v74
    %v308 = vunpack.c.l.b16 %v75
    %v309 = vunpack.c.h.b16 %v75
    %v310 = vunpack.c.l.b16 %v76
    %v311 = vunpack.c.h.b16 %v76
    %v312 = vunpack.c.l.b16 %v77
    %v313 = vunpack.c.h.b16 %v77
    %v314 = vunpack.c.l.b16 %v78
    %v315 = vunpack.c.h.b16 %v78
    %v316 = vunpack.c.l.b16 %v79
    %v317 = vunpack.c.h.b16 %v79
    %v318 = vunpack.c.l.b16 %v80
    %v319 = vunpack.c.h.b16 %v80
    %v320 = vunpack.c.l.b16 %v81
    %v321 = vunpack.c.h.b16 %v81
    %v322 = vunpack.c.l.b16 %v82
    %v323 = vunpack.c.h.b16 %v82
    %v324 = vunpack.c.l.b16 %v83
    %v325 = vunpack.c.h.b16 %v83
    %v326 = vunpack.c.l.b16 %v84
    %v327 = vunpack.c.h.b16 %v84
    %v328 = vunpack.c.l.b16 %v85
    %v329 = vunpack.c.h.b16 %v85
    %v330 = vunpack.c.l.b16 %v86
    %v331 = vunpack.c.h.b16 %v86
    %v332 = vunpack.c.l.b16 %v87
    %v333 = vunpack.c.h.b16 %v87
    %v334 = vunpack.c.l.b16 %v88
    %v335 = vunpack.c.h.b16 %v88
    %v336 = vunpack.c.l.b16 %v89
    %v337 = vunpack.c.h.b16 %v89
    %v338 = vunpack.c.l.b16 %v90
    %v339 = vunpack.c.h.b16 %v90
    %v340 = vunpack.c.l.b16 %v91
    %v341 = vunpack.c.h.b16 %v91
    %v342 = vunpack.c.l.b16 %v92
    %v343 = vunpack.c.h.b16 %v92
    %v344 = vunpack.c.l.b16 %v93
    %v345 = vunpack.c.h.b16 %v93
    %v346 = vunpack.c.l.b16 %v94
    %v347 = vunpack.c.h.b16 %v94
    %v348 = vunpack.c.l.b16 %v95
    %v349 = vunpack.c.h.b16 %v95
    %v350 = vunpack.c.l.b16 %v96
    %v351 = vunpack.c.h.b16 %v96
    %v352 = vunpack.c.l.b16 %v97
    %v353 = vunpack.c.h.b16 %v97
    %v354 = vunpack.c.l.b16 %v98
    %v355 = vunpack.c.h.b16 %v98
    %v356 = vunpack.c.l.b16 %v99
    %v357 = vunpack.c.h.b16 %v99
    %v358 = vunpack.c.l.b16 %v100
    %v359 = vunpack.c.h.b16 %v100
    %v360 = vunpack.c.l.b16 %v101
    %v361 = vunpack.c.h.b16 %v101
    %v362 = vunpack.c.l.b16 %v102
    %v363 = vunpack.c.h.b16 %v102
    %v364 = vunpack.c.l.b16 %v103
    %v365 = vunpack.c.h.b16 %v103
    %v366 = vunpack.c.l.b16 %v104
    %v367 = vunpack.c.h.b16 %v104
    %v368 = vunpack.c.l.b16 %v105
    %v369 = vunpack.c.h.b16 %v105
    %v370 = vunpack.c.l.b16 %v106
    %v371 = vunpack.c.h.b16 %v106
    %v372 = vunpack.c.l.b16 %v107
    %v373 = vunpack.c.h.b16 %v107
    %v374 = vunpack.c.l.b16 %v108
    %v375 = vunpack.c.h.b16 %v108
    %v376 = vunpack.c.l.b16 %v109
    %v377 = vunpack.c.h.b16 %v109
    %v378 = vunpack.c.l.b16 %v110
    %v379 = vunpack.c.h.b16 %v110
    %v380 = vunpack.c.l.b16 %v111
    %v381 = vunpack.c.h.b16 %v111
    %v382 = vunpack.c.l.b16 %v112
    %v383 = vunpack.c.h.b16 %v112
    %v384 = vunpack.c.l.b16 %v113
    %v385 = vunpack.c.h.b16 %v113
    %v386 = vunpack.c.l.b16 %v114
    %v387 = vunpack.c.h.b16 %v114
    %v388 = vunpack.c.l.b16 %v115
    %v389 = vunpack.c.h.b16 %v115
    %v390 = vunpack.c.l.b16 %v116
    %v391 = vunpack.c.h.b16 %v116
    %v392 = vunpack.c.l.b16 %v117
    %v393 = vunpack.c.h.b16 %v117
    %v394 = vunpack.c.l.b16 %v118
    %v395 = vunpack.c.h.b16 %v118
    %v396 = vunpack.c.l.b16 %v119
    %v397 = vunpack.c.h.b16 %v119
    %v398 = vunpack.c.l.b16 %v120
    %v399 = vunpack.c.h.b16 %v120
    %v400 = vunpack.c.l.b16 %v121
    %v401 = vunpack.c.h.b16 %v121
    %v402 = vunpack.c.l.b16 %v122
    %v403 = vunpack.c.h.b16 %v122
    %v404 = vunpack.c.l.b16 %v123
    %v405 = vunpack.c.h.b16 %v123
    %v406 = vunpack.c.l.b16 %v124
    %v407 = vunpack.c.h.b16 %v124
    %v408 = vunpack.c.l.b16 %v125
    %v409 = vunpack.c.h.b16 %v125
    %v410 = vunpack.c.l.b16 %v126
    %v411 = vunpack.c.h.b16 %v126
    %v412 = vunpack.c.l.b16 %v127
    %v413 = vunpack.c.h.b16 %v127
    %v414 = vunpack.c.l.b16 %v128
    %v415 = vunpack.c.h.b16 %v128
    %v416 = vunpack.c.l.b16 %v129
    %v417 = vunpack.c.h.b16 %v129
    %v418 = vpack.c.b16 %v228, %v226
    %v419 = vpack.c.b16 %v229, %v227
    %v420 = vpack.c.b16 %v232, %v230
    %v421 = vpack.c.b16 %v233, %v231
    %v422 = vpack.c.b16 %v236, %v234
    %v423 = vpack.c.b16 %v237, %v235
    %v424 = vpack.c.b16 %v240, %v238
    %v425 = vpack.c.b16 %v241, %v239
    %v426 = vpack.c.b16 %v244, %v242
    %v427 = vpack.c.b16 %v245, %v243
    %v428 = vpack.c.b16 %v248, %v246
    %v429 = vpack.c.b16 %v249, %v247
    %v430 = vpack.c.b16 %v252, %v250
    %v431 = vpack.c.b16 %v253, %v251
    %v432 = vpack.c.b16 %v256, %v254
    %v433 = vpack.c.b16 %v257, %v255
    %v434 = vpack.c.b16 %v260, %v258
    %v435 = vpack.c.b16 %v261, %v259
    %v436 = vpack.c.b16 %v264, %v262
    %v437 = vpack.c.b16 %v265, %v263
    %v438 = vpack.c.b16 %v268, %v266
    %v439 = vpack.c.b16 %v269, %v267
    %v440 = vpack.c.b16 %v272, %v270
    %v441 = vpack.c.b16 %v273, %v271
    %v442 = vpack.c.b16 %v276, %v274
    %v443 = vpack.c.b16 %v277, %v275
    %v444 = vpack.c.b16 %v280, %v278
    %v445 = vpack.c.b16 %v281, %v279
    %v446 = vpack.c.b16 %v284, %v282
    %v447 = vpack.c.b16 %v285, %v283
    %v448 = vpack.c.b16 %v288, %v286
    %v449 = vpack.c.b16 %v289, %v287
    %v450 = vpack.c.b16 %v292, %v290
    %v451 = vpack.c.b16 %v293, %v291
    %v452 = vpack.c.b16 %v296, %v294
    %v453 = vpack.c.b16 %v297, %v295
    %v454 = vpack.c.b16 %v300, %v298
    %v455 = vpack.c.b16 %v301, %v299
    %v456 = vpack.c.b16 %v304, %v302
    %v457 = vpack.c.b16 %v305, %v303
    %v458 = vpack.c.b16 %v308, %v306
    %v459 = vpack.c.b16 %v309, %v307
    %v460 = vpack.c.b16 %v312, %v310
    %v461 = vpack.c.b16 %v313, %v311
    %v462 = vpack.c.b16 %v316, %v314
    %v463 = vpack.c.b16 %v317, %v315
    %v464 = vpack.c.b16 %v320, %v318
    %v465 = vpack.c.b16 %v321, %v319
    %v466 = vpack.c.b16 %v324, %v322
    %v467 = vpack.c.b16 %v325, %v323
    %v468 = vpack.c.b16 %v328, %v326
    %v469 = vpack.c.b16 %v329, %v327
    %v470 = vpack.c.b16 %v332, %v330
    %v471 = vpack.c.b16 %v333, %v331
    %v472 = vpack.c.b16 %v336, %v334
    %v473 = vpack.c.b16 %v337, %v335
    %v474 = vpack.c.b16 %v340, %v338
    %v475 = vpack.c.b16 %v341, %v339
    %v476 = vpack.c.b16 %v344, %v342
    %v477 = vpack.c.b16 %v345, %v343
    %v478 = vpack.c.b16 %v348, %v346
    %v479 = vpack.c.b16 %v349, %v347
    %v480 = vpack.c.b16 %v352, %v350
    %v481 = vpack.c.b16 %v353, %v351
    %v482 = vpack.c.b16 %v356, %v354
    %v483 = vpack.c.b16 %v357, %v355
    %v484 = vpack.c.b16 %v360, %v358
    %v485 = vpack.c.b16 %v361, %v359
    %v486 = vpack.c.b16 %v364, %v362
    %v487 = vpack.c.b16 %v365, %v363
    %v488 = vpack.c.b16 %v368, %v366
    %v489 = vpack.c.b16 %v369, %v367
    %v490 = vpack.c.b16 %v372, %v370
    %v491 = vpack.c.b16 %v373, %v371
    %v492 = vpack.c.b16 %v376, %v374
    %v493 = vpack.c.b16 %v377, %v375
    %v494 = vpack.c.b16 %v380, %v378
    %v495 = vpack.c.b16 %v381, %v379
    %v496 = vpack.c.b16 %v384, %v382
    %v497 = vpack.c.b16 %v385, %v383
    %v498 = vpack.c.b16 %v388, %v386
    %v499 = vpack.c.b16 %v389, %v387
    %v500 = vpack.c.b16 %v392, %v390
    %v501 = vpack.c.b16 %v393, %v391
    %v502 = vpack.c.b16 %v396, %v394
    %v503 = vpack.c.b16 %v397, %v395
    %v504 = vpack.c.b16 %v400, %v398
    %v505 = vpack.c.b16 %v401, %v399
    %v506 = vpack.c.b16 %v404, %v402
    %v507 = vpack.c.b16 %v405, %v403
    %v508 = vpack.c.b16 %v408, %v406
    %v509 = vpack.c.b16 %v409, %v407
    %v510 = vpack.c.b16 %v412, %v410
    %v511 = vpack.c.b16 %v413, %v411
    %v512 = vpack.c.b16 %v416, %v414
    %v513 = vpack.c.b16 %v417, %v415
    %610 = vmatprep.subr.bf16.mxu0 %v433
    %611 = vmatpush1.bf16.msra.mxu0 %v432
    %612 = vmatprep.subr.bf16.mxu0 %v431
    %613 = vmatpush1.bf16.msra.mxu0 %v430
    %614 = vmatprep.subr.bf16.mxu0 %v429
    %615 = vmatpush1.bf16.msra.mxu0 %v428
    %616 = vmatprep.subr.bf16.mxu0 %v427
    %617 = vmatpush1.bf16.msra.mxu0 %v426
    %618 = vmatprep.subr.bf16.mxu0 %v425
    %619 = vmatpush1.bf16.msra.mxu0 %v424
    %620 = vmatprep.subr.bf16.mxu0 %v423
    %621 = vmatpush1.bf16.msra.mxu0 %v422
    %622 = vmatprep.subr.bf16.mxu0 %v421
    %623 = vmatpush1.bf16.msra.mxu0 %v420
    %624 = vmatprep.subr.bf16.mxu0 %v419
    %625 = vmatpush1.bf16.msra.mxu0 %v418
    %626 = vmatprep.subr.bf16.mxu0 %v449
    %627 = vmatpush2.bf16.msra.mxu0 %v448
    %628 = vmatprep.subr.bf16.mxu0 %v447
    %629 = vmatpush2.bf16.msra.mxu0 %v446
    %630 = vmatprep.subr.bf16.mxu0 %v445
    %631 = vmatpush2.bf16.msra.mxu0 %v444
    %632 = vmatprep.subr.bf16.mxu0 %v443
    %633 = vmatpush2.bf16.msra.mxu0 %v442
    %634 = vmatprep.subr.bf16.mxu0 %v441
    %635 = vmatpush2.bf16.msra.mxu0 %v440
    %636 = vmatprep.subr.bf16.mxu0 %v439
    %637 = vmatpush2.bf16.msra.mxu0 %v438
    %638 = vmatprep.subr.bf16.mxu0 %v437
    %639 = vmatpush2.bf16.msra.mxu0 %v436
    %640 = vmatprep.subr.bf16.mxu0 %v435
    %641 = vmatpush2.bf16.msra.mxu0 %v434
    %642 = vmatprep.mubr.bf16.mxu0 %v29
    %643 = vmatmul.mubr.bf16.gmra.mxu0 %v28
    %v644 = vpop.f32.mrf.mxu0
    %v645 = vadd.f32 0.0, %v644
    %v646 = vpop.f32.mrf.mxu0
    %v647 = vadd.f32 0.0, %v646
    %v648 = vpop.f32.mrf.mxu0
    %v649 = vpop.f32.mrf.mxu0
    %650 = vdwg.mxu0
    %651 = vmatprep.subr.bf16.mxu0 %v465
    %652 = vmatpush1.bf16.msra.mxu0 %v464
    %653 = vmatprep.subr.bf16.mxu0 %v463
    %654 = vmatpush1.bf16.msra.mxu0 %v462
    %655 = vmatprep.subr.bf16.mxu0 %v461
    %656 = vmatpush1.bf16.msra.mxu0 %v460
    %657 = vmatprep.subr.bf16.mxu0 %v459
    %658 = vmatpush1.bf16.msra.mxu0 %v458
    %659 = vmatprep.subr.bf16.mxu0 %v457
    %660 = vmatpush1.bf16.msra.mxu0 %v456
    %661 = vmatprep.subr.bf16.mxu0 %v455
    %662 = vmatpush1.bf16.msra.mxu0 %v454
    %663 = vmatprep.subr.bf16.mxu0 %v453
    %664 = vmatpush1.bf16.msra.mxu0 %v452
    %665 = vmatprep.subr.bf16.mxu0 %v451
    %666 = vmatpush1.bf16.msra.mxu0 %v450
    %667 = vmatprep.subr.bf16.mxu0 %v481
    %668 = vmatpush2.bf16.msra.mxu0 %v480
    %669 = vmatprep.subr.bf16.mxu0 %v479
    %670 = vmatpush2.bf16.msra.mxu0 %v478
    %671 = vmatprep.subr.bf16.mxu0 %v477
    %672 = vmatpush2.bf16.msra.mxu0 %v476
    %673 = vmatprep.subr.bf16.mxu0 %v475
    %674 = vmatpush2.bf16.msra.mxu0 %v474
    %675 = vmatprep.subr.bf16.mxu0 %v473
    %676 = vmatpush2.bf16.msra.mxu0 %v472
    %677 = vmatprep.subr.bf16.mxu0 %v471
    %678 = vmatpush2.bf16.msra.mxu0 %v470
    %679 = vmatprep.subr.bf16.mxu0 %v469
    %680 = vmatpush2.bf16.msra.mxu0 %v468
    %681 = vmatprep.subr.bf16.mxu0 %v467
    %682 = vmatpush2.bf16.msra.mxu0 %v466
    %683 = vmatprep.mubr.bf16.mxu0 %v31
    %684 = vmatmul.mubr.bf16.gmra.mxu0 %v30
    %v685 = vpop.f32.mrf.mxu0
    %v686 = vadd.f32 %v645, %v685
    %v687 = vpop.f32.mrf.mxu0
    %v688 = vadd.f32 %v647, %v687
    %v689 = vpop.f32.mrf.mxu0
    %v690 = vpop.f32.mrf.mxu0
    %691 = vdwg.mxu0
    %692 = vmatprep.subr.bf16.mxu0 %v497
    %693 = vmatpush1.bf16.msra.mxu0 %v496
    %694 = vmatprep.subr.bf16.mxu0 %v495
    %695 = vmatpush1.bf16.msra.mxu0 %v494
    %696 = vmatprep.subr.bf16.mxu0 %v493
    %697 = vmatpush1.bf16.msra.mxu0 %v492
    %698 = vmatprep.subr.bf16.mxu0 %v491
    %699 = vmatpush1.bf16.msra.mxu0 %v490
    %700 = vmatprep.subr.bf16.mxu0 %v489
    %701 = vmatpush1.bf16.msra.mxu0 %v488
    %702 = vmatprep.subr.bf16.mxu0 %v487
    %703 = vmatpush1.bf16.msra.mxu0 %v486
    %704 = vmatprep.subr.bf16.mxu0 %v485
    %705 = vmatpush1.bf16.msra.mxu0 %v484
    %706 = vmatprep.subr.bf16.mxu0 %v483
    %707 = vmatpush1.bf16.msra.mxu0 %v482
    %708 = vmatprep.subr.bf16.mxu0 %v513
    %709 = vmatpush2.bf16.msra.mxu0 %v512
    %710 = vmatprep.subr.bf16.mxu0 %v511
    %711 = vmatpush2.bf16.msra.mxu0 %v510
    %712 = vmatprep.subr.bf16.mxu0 %v509
    %713 = vmatpush2.bf16.msra.mxu0 %v508
    %714 = vmatprep.subr.bf16.mxu0 %v507
    %715 = vmatpush2.bf16.msra.mxu0 %v506
    %716 = vmatprep.subr.bf16.mxu0 %v505
    %717 = vmatpush2.bf16.msra.mxu0 %v504
    %718 = vmatprep.subr.bf16.mxu0 %v503
    %719 = vmatpush2.bf16.msra.mxu0 %v502
    %720 = vmatprep.subr.bf16.mxu0 %v501
    %721 = vmatpush2.bf16.msra.mxu0 %v500
    %722 = vmatprep.subr.bf16.mxu0 %v499
    %723 = vmatpush2.bf16.msra.mxu0 %v498
    %724 = vmatprep.mubr.bf16.mxu0 %v33
    %725 = vmatmul.mubr.bf16.gmra.mxu0 %v32
    %v726 = vpop.f32.mrf.mxu0
    %v727 = vadd.f32 %v686, %v726
    %v728 = vpop.f32.mrf.mxu0
    %v729 = vadd.f32 %v688, %v728
    %v730 = vpop.f32.mrf.mxu0
    %v731 = vpop.f32.mrf.mxu0
    %732 = vdwg.mxu0
    %s733 = scalar_lea.vmem %s1, 768
    %v734 = vld [vmem:[%s733] sm:$0xff]
    %v735 = vld [vmem:[%s733 + $0x8] sm:$0xff]
    %v736 = vld [vmem:[%s733 + $0x10] sm:$0xff]
    %v737 = vld [vmem:[%s733 + $0x18] sm:$0xff]
    %v738 = vld [vmem:[%s733 + $0x20] sm:$0xff]
    %v739 = vld [vmem:[%s733 + $0x28] sm:$0xff]
    %v740 = vld [vmem:[%s733 + $0x30] sm:$0xff]
    %v741 = vld [vmem:[%s733 + $0x38] sm:$0xff]
    %v742 = vld [vmem:[%s733 + $0x40] sm:$0xff]
    %v743 = vld [vmem:[%s733 + $0x48] sm:$0xff]
    %v744 = vld [vmem:[%s733 + $0x50] sm:$0xff]
    %v745 = vld [vmem:[%s733 + $0x58] sm:$0xff]
    %v746 = vld [vmem:[%s733 + $0x60] sm:$0xff]
    %v747 = vld [vmem:[%s733 + $0x68] sm:$0xff]
    %v748 = vld [vmem:[%s733 + $0x70] sm:$0xff]
    %v749 = vld [vmem:[%s733 + $0x78] sm:$0xff]
    %v750 = vld [vmem:[%s733 + $0x80] sm:$0xff]
    %v751 = vld [vmem:[%s733 + $0x88] sm:$0xff]
    %v752 = vld [vmem:[%s733 + $0x90] sm:$0xff]
    %v753 = vld [vmem:[%s733 + $0x98] sm:$0xff]
    %v754 = vld [vmem:[%s733 + $0xa0] sm:$0xff]
    %v755 = vld [vmem:[%s733 + $0xa8] sm:$0xff]
    %v756 = vld [vmem:[%s733 + $0xb0] sm:$0xff]
    %v757 = vld [vmem:[%s733 + $0xb8] sm:$0xff]
    %v758 = vld [vmem:[%s733 + $0xc0] sm:$0xff]
    %v759 = vld [vmem:[%s733 + $0xc8] sm:$0xff]
    %v760 = vld [vmem:[%s733 + $0xd0] sm:$0xff]
    %v761 = vld [vmem:[%s733 + $0xd8] sm:$0xff]
    %v762 = vld [vmem:[%s733 + $0xe0] sm:$0xff]
    %v763 = vld [vmem:[%s733 + $0xe8] sm:$0xff]
    %v764 = vld [vmem:[%s733 + $0xf0] sm:$0xff]
    %v765 = vld [vmem:[%s733 + $0xf8] sm:$0xff]
    %v766 = vld [vmem:[%s733 + $0x100] sm:$0xff]
    %v767 = vld [vmem:[%s733 + $0x108] sm:$0xff]
    %v768 = vld [vmem:[%s733 + $0x110] sm:$0xff]
    %v769 = vld [vmem:[%s733 + $0x118] sm:$0xff]
    %v770 = vld [vmem:[%s733 + $0x120] sm:$0xff]
    %v771 = vld [vmem:[%s733 + $0x128] sm:$0xff]
    %v772 = vld [vmem:[%s733 + $0x130] sm:$0xff]
    %v773 = vld [vmem:[%s733 + $0x138] sm:$0xff]
    %v774 = vld [vmem:[%s733 + $0x140] sm:$0xff]
    %v775 = vld [vmem:[%s733 + $0x148] sm:$0xff]
    %v776 = vld [vmem:[%s733 + $0x150] sm:$0xff]
    %v777 = vld [vmem:[%s733 + $0x158] sm:$0xff]
    %v778 = vld [vmem:[%s733 + $0x160] sm:$0xff]
    %v779 = vld [vmem:[%s733 + $0x168] sm:$0xff]
    %v780 = vld [vmem:[%s733 + $0x170] sm:$0xff]
    %v781 = vld [vmem:[%s733 + $0x178] sm:$0xff]
    %v782 = vld [vmem:[%s733 + $0x180] sm:$0xff]
    %v783 = vld [vmem:[%s733 + $0x188] sm:$0xff]
    %v784 = vld [vmem:[%s733 + $0x190] sm:$0xff]
    %v785 = vld [vmem:[%s733 + $0x198] sm:$0xff]
    %v786 = vld [vmem:[%s733 + $0x1a0] sm:$0xff]
    %v787 = vld [vmem:[%s733 + $0x1a8] sm:$0xff]
    %v788 = vld [vmem:[%s733 + $0x1b0] sm:$0xff]
    %v789 = vld [vmem:[%s733 + $0x1b8] sm:$0xff]
    %v790 = vld [vmem:[%s733 + $0x1c0] sm:$0xff]
    %v791 = vld [vmem:[%s733 + $0x1c8] sm:$0xff]
    %v792 = vld [vmem:[%s733 + $0x1d0] sm:$0xff]
    %v793 = vld [vmem:[%s733 + $0x1d8] sm:$0xff]
    %v794 = vld [vmem:[%s733 + $0x1e0] sm:$0xff]
    %v795 = vld [vmem:[%s733 + $0x1e8] sm:$0xff]
    %v796 = vld [vmem:[%s733 + $0x1f0] sm:$0xff]
    %v797 = vld [vmem:[%s733 + $0x1f8] sm:$0xff]
    %v798 = vld [vmem:[%s733 + $0x200] sm:$0xff]
    %v799 = vld [vmem:[%s733 + $0x208] sm:$0xff]
    %v800 = vld [vmem:[%s733 + $0x210] sm:$0xff]
    %v801 = vld [vmem:[%s733 + $0x218] sm:$0xff]
    %v802 = vld [vmem:[%s733 + $0x220] sm:$0xff]
    %v803 = vld [vmem:[%s733 + $0x228] sm:$0xff]
    %v804 = vld [vmem:[%s733 + $0x230] sm:$0xff]
    %v805 = vld [vmem:[%s733 + $0x238] sm:$0xff]
    %v806 = vld [vmem:[%s733 + $0x240] sm:$0xff]
    %v807 = vld [vmem:[%s733 + $0x248] sm:$0xff]
    %v808 = vld [vmem:[%s733 + $0x250] sm:$0xff]
    %v809 = vld [vmem:[%s733 + $0x258] sm:$0xff]
    %v810 = vld [vmem:[%s733 + $0x260] sm:$0xff]
    %v811 = vld [vmem:[%s733 + $0x268] sm:$0xff]
    %v812 = vld [vmem:[%s733 + $0x270] sm:$0xff]
    %v813 = vld [vmem:[%s733 + $0x278] sm:$0xff]
    %v814 = vld [vmem:[%s733 + $0x280] sm:$0xff]
    %v815 = vld [vmem:[%s733 + $0x288] sm:$0xff]
    %v816 = vld [vmem:[%s733 + $0x290] sm:$0xff]
    %v817 = vld [vmem:[%s733 + $0x298] sm:$0xff]
    %v818 = vld [vmem:[%s733 + $0x2a0] sm:$0xff]
    %v819 = vld [vmem:[%s733 + $0x2a8] sm:$0xff]
    %v820 = vld [vmem:[%s733 + $0x2b0] sm:$0xff]
    %v821 = vld [vmem:[%s733 + $0x2b8] sm:$0xff]
    %v822 = vld [vmem:[%s733 + $0x2c0] sm:$0xff]
    %v823 = vld [vmem:[%s733 + $0x2c8] sm:$0xff]
    %v824 = vld [vmem:[%s733 + $0x2d0] sm:$0xff]
    %v825 = vld [vmem:[%s733 + $0x2d8] sm:$0xff]
    %v826 = vld [vmem:[%s733 + $0x2e0] sm:$0xff]
    %v827 = vld [vmem:[%s733 + $0x2e8] sm:$0xff]
    %v828 = vld [vmem:[%s733 + $0x2f0] sm:$0xff]
    %v829 = vld [vmem:[%s733 + $0x2f8] sm:$0xff]
    %v926 = vunpack.c.l.b16 %v734
    %v927 = vunpack.c.h.b16 %v734
    %v928 = vunpack.c.l.b16 %v735
    %v929 = vunpack.c.h.b16 %v735
    %v930 = vunpack.c.l.b16 %v736
    %v931 = vunpack.c.h.b16 %v736
    %v932 = vunpack.c.l.b16 %v737
    %v933 = vunpack.c.h.b16 %v737
    %v934 = vunpack.c.l.b16 %v738
    %v935 = vunpack.c.h.b16 %v738
    %v936 = vunpack.c.l.b16 %v739
    %v937 = vunpack.c.h.b16 %v739
    %v938 = vunpack.c.l.b16 %v740
    %v939 = vunpack.c.h.b16 %v740
    %v940 = vunpack.c.l.b16 %v741
    %v941 = vunpack.c.h.b16 %v741
    %v942 = vunpack.c.l.b16 %v742
    %v943 = vunpack.c.h.b16 %v742
    %v944 = vunpack.c.l.b16 %v743
    %v945 = vunpack.c.h.b16 %v743
    %v946 = vunpack.c.l.b16 %v744
    %v947 = vunpack.c.h.b16 %v744
    %v948 = vunpack.c.l.b16 %v745
    %v949 = vunpack.c.h.b16 %v745
    %v950 = vunpack.c.l.b16 %v746
    %v951 = vunpack.c.h.b16 %v746
    %v952 = vunpack.c.l.b16 %v747
    %v953 = vunpack.c.h.b16 %v747
    %v954 = vunpack.c.l.b16 %v748
    %v955 = vunpack.c.h.b16 %v748
    %v956 = vunpack.c.l.b16 %v749
    %v957 = vunpack.c.h.b16 %v749
    %v958 = vunpack.c.l.b16 %v750
    %v959 = vunpack.c.h.b16 %v750
    %v960 = vunpack.c.l.b16 %v751
    %v961 = vunpack.c.h.b16 %v751
    %v962 = vunpack.c.l.b16 %v752
    %v963 = vunpack.c.h.b16 %v752
    %v964 = vunpack.c.l.b16 %v753
    %v965 = vunpack.c.h.b16 %v753
    %v966 = vunpack.c.l.b16 %v754
    %v967 = vunpack.c.h.b16 %v754
    %v968 = vunpack.c.l.b16 %v755
    %v969 = vunpack.c.h.b16 %v755
    %v970 = vunpack.c.l.b16 %v756
    %v971 = vunpack.c.h.b16 %v756
    %v972 = vunpack.c.l.b16 %v757
    %v973 = vunpack.c.h.b16 %v757
    %v974 = vunpack.c.l.b16 %v758
    %v975 = vunpack.c.h.b16 %v758
    %v976 = vunpack.c.l.b16 %v759
    %v977 = vunpack.c.h.b16 %v759
    %v978 = vunpack.c.l.b16 %v760
    %v979 = vunpack.c.h.b16 %v760
    %v980 = vunpack.c.l.b16 %v761
    %v981 = vunpack.c.h.b16 %v761
    %v982 = vunpack.c.l.b16 %v762
    %v983 = vunpack.c.h.b16 %v762
    %v984 = vunpack.c.l.b16 %v763
    %v985 = vunpack.c.h.b16 %v763
    %v986 = vunpack.c.l.b16 %v764
    %v987 = vunpack.c.h.b16 %v764
    %v988 = vunpack.c.l.b16 %v765
    %v989 = vunpack.c.h.b16 %v765
    %v990 = vunpack.c.l.b16 %v766
    %v991 = vunpack.c.h.b16 %v766
    %v992 = vunpack.c.l.b16 %v767
    %v993 = vunpack.c.h.b16 %v767
    %v994 = vunpack.c.l.b16 %v768
    %v995 = vunpack.c.h.b16 %v768
    %v996 = vunpack.c.l.b16 %v769
    %v997 = vunpack.c.h.b16 %v769
    %v998 = vunpack.c.l.b16 %v770
    %v999 = vunpack.c.h.b16 %v770
    %v1000 = vunpack.c.l.b16 %v771
    %v1001 = vunpack.c.h.b16 %v771
    %v1002 = vunpack.c.l.b16 %v772
    %v1003 = vunpack.c.h.b16 %v772
    %v1004 = vunpack.c.l.b16 %v773
    %v1005 = vunpack.c.h.b16 %v773
    %v1006 = vunpack.c.l.b16 %v774
    %v1007 = vunpack.c.h.b16 %v774
    %v1008 = vunpack.c.l.b16 %v775
    %v1009 = vunpack.c.h.b16 %v775
    %v1010 = vunpack.c.l.b16 %v776
    %v1011 = vunpack.c.h.b16 %v776
    %v1012 = vunpack.c.l.b16 %v777
    %v1013 = vunpack.c.h.b16 %v777
    %v1014 = vunpack.c.l.b16 %v778
    %v1015 = vunpack.c.h.b16 %v778
    %v1016 = vunpack.c.l.b16 %v779
    %v1017 = vunpack.c.h.b16 %v779
    %v1018 = vunpack.c.l.b16 %v780
    %v1019 = vunpack.c.h.b16 %v780
    %v1020 = vunpack.c.l.b16 %v781
    %v1021 = vunpack.c.h.b16 %v781
    %v1022 = vunpack.c.l.b16 %v782
    %v1023 = vunpack.c.h.b16 %v782
    %v1024 = vunpack.c.l.b16 %v783
    %v1025 = vunpack.c.h.b16 %v783
    %v1026 = vunpack.c.l.b16 %v784
    %v1027 = vunpack.c.h.b16 %v784
    %v1028 = vunpack.c.l.b16 %v785
    %v1029 = vunpack.c.h.b16 %v785
    %v1030 = vunpack.c.l.b16 %v786
    %v1031 = vunpack.c.h.b16 %v786
    %v1032 = vunpack.c.l.b16 %v787
    %v1033 = vunpack.c.h.b16 %v787
    %v1034 = vunpack.c.l.b16 %v788
    %v1035 = vunpack.c.h.b16 %v788
    %v1036 = vunpack.c.l.b16 %v789
    %v1037 = vunpack.c.h.b16 %v789
    %v1038 = vunpack.c.l.b16 %v790
    %v1039 = vunpack.c.h.b16 %v790
    %v1040 = vunpack.c.l.b16 %v791
    %v1041 = vunpack.c.h.b16 %v791
    %v1042 = vunpack.c.l.b16 %v792
    %v1043 = vunpack.c.h.b16 %v792
    %v1044 = vunpack.c.l.b16 %v793
    %v1045 = vunpack.c.h.b16 %v793
    %v1046 = vunpack.c.l.b16 %v794
    %v1047 = vunpack.c.h.b16 %v794
    %v1048 = vunpack.c.l.b16 %v795
    %v1049 = vunpack.c.h.b16 %v795
    %v1050 = vunpack.c.l.b16 %v796
    %v1051 = vunpack.c.h.b16 %v796
    %v1052 = vunpack.c.l.b16 %v797
    %v1053 = vunpack.c.h.b16 %v797
    %v1054 = vunpack.c.l.b16 %v798
    %v1055 = vunpack.c.h.b16 %v798
    %v1056 = vunpack.c.l.b16 %v799
    %v1057 = vunpack.c.h.b16 %v799
    %v1058 = vunpack.c.l.b16 %v800
    %v1059 = vunpack.c.h.b16 %v800
    %v1060 = vunpack.c.l.b16 %v801
    %v1061 = vunpack.c.h.b16 %v801
    %v1062 = vunpack.c.l.b16 %v802
    %v1063 = vunpack.c.h.b16 %v802
    %v1064 = vunpack.c.l.b16 %v803
    %v1065 = vunpack.c.h.b16 %v803
    %v1066 = vunpack.c.l.b16 %v804
    %v1067 = vunpack.c.h.b16 %v804
    %v1068 = vunpack.c.l.b16 %v805
    %v1069 = vunpack.c.h.b16 %v805
    %v1070 = vunpack.c.l.b16 %v806
    %v1071 = vunpack.c.h.b16 %v806
    %v1072 = vunpack.c.l.b16 %v807
    %v1073 = vunpack.c.h.b16 %v807
    %v1074 = vunpack.c.l.b16 %v808
    %v1075 = vunpack.c.h.b16 %v808
    %v1076 = vunpack.c.l.b16 %v809
    %v1077 = vunpack.c.h.b16 %v809
    %v1078 = vunpack.c.l.b16 %v810
    %v1079 = vunpack.c.h.b16 %v810
    %v1080 = vunpack.c.l.b16 %v811
    %v1081 = vunpack.c.h.b16 %v811
    %v1082 = vunpack.c.l.b16 %v812
    %v1083 = vunpack.c.h.b16 %v812
    %v1084 = vunpack.c.l.b16 %v813
    %v1085 = vunpack.c.h.b16 %v813
    %v1086 = vunpack.c.l.b16 %v814
    %v1087 = vunpack.c.h.b16 %v814
    %v1088 = vunpack.c.l.b16 %v815
    %v1089 = vunpack.c.h.b16 %v815
    %v1090 = vunpack.c.l.b16 %v816
    %v1091 = vunpack.c.h.b16 %v816
    %v1092 = vunpack.c.l.b16 %v817
    %v1093 = vunpack.c.h.b16 %v817
    %v1094 = vunpack.c.l.b16 %v818
    %v1095 = vunpack.c.h.b16 %v818
    %v1096 = vunpack.c.l.b16 %v819
    %v1097 = vunpack.c.h.b16 %v819
    %v1098 = vunpack.c.l.b16 %v820
    %v1099 = vunpack.c.h.b16 %v820
    %v1100 = vunpack.c.l.b16 %v821
    %v1101 = vunpack.c.h.b16 %v821
    %v1102 = vunpack.c.l.b16 %v822
    %v1103 = vunpack.c.h.b16 %v822
    %v1104 = vunpack.c.l.b16 %v823
    %v1105 = vunpack.c.h.b16 %v823
    %v1106 = vunpack.c.l.b16 %v824
    %v1107 = vunpack.c.h.b16 %v824
    %v1108 = vunpack.c.l.b16 %v825
    %v1109 = vunpack.c.h.b16 %v825
    %v1110 = vunpack.c.l.b16 %v826
    %v1111 = vunpack.c.h.b16 %v826
    %v1112 = vunpack.c.l.b16 %v827
    %v1113 = vunpack.c.h.b16 %v827
    %v1114 = vunpack.c.l.b16 %v828
    %v1115 = vunpack.c.h.b16 %v828
    %v1116 = vunpack.c.l.b16 %v829
    %v1117 = vunpack.c.h.b16 %v829
    %v1118 = vpack.c.b16 %v928, %v926
    %v1119 = vpack.c.b16 %v929, %v927
    %v1120 = vpack.c.b16 %v932, %v930
    %v1121 = vpack.c.b16 %v933, %v931
    %v1122 = vpack.c.b16 %v936, %v934
    %v1123 = vpack.c.b16 %v937, %v935
    %v1124 = vpack.c.b16 %v940, %v938
    %v1125 = vpack.c.b16 %v941, %v939
    %v1126 = vpack.c.b16 %v944, %v942
    %v1127 = vpack.c.b16 %v945, %v943
    %v1128 = vpack.c.b16 %v948, %v946
    %v1129 = vpack.c.b16 %v949, %v947
    %v1130 = vpack.c.b16 %v952, %v950
    %v1131 = vpack.c.b16 %v953, %v951
    %v1132 = vpack.c.b16 %v956, %v954
    %v1133 = vpack.c.b16 %v957, %v955
    %v1134 = vpack.c.b16 %v960, %v958
    %v1135 = vpack.c.b16 %v961, %v959
    %v1136 = vpack.c.b16 %v964, %v962
    %v1137 = vpack.c.b16 %v965, %v963
    %v1138 = vpack.c.b16 %v968, %v966
    %v1139 = vpack.c.b16 %v969, %v967
    %v1140 = vpack.c.b16 %v972, %v970
    %v1141 = vpack.c.b16 %v973, %v971
    %v1142 = vpack.c.b16 %v976, %v974
    %v1143 = vpack.c.b16 %v977, %v975
    %v1144 = vpack.c.b16 %v980, %v978
    %v1145 = vpack.c.b16 %v981, %v979
    %v1146 = vpack.c.b16 %v984, %v982
    %v1147 = vpack.c.b16 %v985, %v983
    %v1148 = vpack.c.b16 %v988, %v986
    %v1149 = vpack.c.b16 %v989, %v987
    %v1150 = vpack.c.b16 %v992, %v990
    %v1151 = vpack.c.b16 %v993, %v991
    %v1152 = vpack.c.b16 %v996, %v994
    %v1153 = vpack.c.b16 %v997, %v995
    %v1154 = vpack.c.b16 %v1000, %v998
    %v1155 = vpack.c.b16 %v1001, %v999
    %v1156 = vpack.c.b16 %v1004, %v1002
    %v1157 = vpack.c.b16 %v1005, %v1003
    %v1158 = vpack.c.b16 %v1008, %v1006
    %v1159 = vpack.c.b16 %v1009, %v1007
    %v1160 = vpack.c.b16 %v1012, %v1010
    %v1161 = vpack.c.b16 %v1013, %v1011
    %v1162 = vpack.c.b16 %v1016, %v1014
    %v1163 = vpack.c.b16 %v1017, %v1015
    %v1164 = vpack.c.b16 %v1020, %v1018
    %v1165 = vpack.c.b16 %v1021, %v1019
    %v1166 = vpack.c.b16 %v1024, %v1022
    %v1167 = vpack.c.b16 %v1025, %v1023
    %v1168 = vpack.c.b16 %v1028, %v1026
    %v1169 = vpack.c.b16 %v1029, %v1027
    %v1170 = vpack.c.b16 %v1032, %v1030
    %v1171 = vpack.c.b16 %v1033, %v1031
    %v1172 = vpack.c.b16 %v1036, %v1034
    %v1173 = vpack.c.b16 %v1037, %v1035
    %v1174 = vpack.c.b16 %v1040, %v1038
    %v1175 = vpack.c.b16 %v1041, %v1039
    %v1176 = vpack.c.b16 %v1044, %v1042
    %v1177 = vpack.c.b16 %v1045, %v1043
    %v1178 = vpack.c.b16 %v1048, %v1046
    %v1179 = vpack.c.b16 %v1049, %v1047
    %v1180 = vpack.c.b16 %v1052, %v1050
    %v1181 = vpack.c.b16 %v1053, %v1051
    %v1182 = vpack.c.b16 %v1056, %v1054
    %v1183 = vpack.c.b16 %v1057, %v1055
    %v1184 = vpack.c.b16 %v1060, %v1058
    %v1185 = vpack.c.b16 %v1061, %v1059
    %v1186 = vpack.c.b16 %v1064, %v1062
    %v1187 = vpack.c.b16 %v1065, %v1063
    %v1188 = vpack.c.b16 %v1068, %v1066
    %v1189 = vpack.c.b16 %v1069, %v1067
    %v1190 = vpack.c.b16 %v1072, %v1070
    %v1191 = vpack.c.b16 %v1073, %v1071
    %v1192 = vpack.c.b16 %v1076, %v1074
    %v1193 = vpack.c.b16 %v1077, %v1075
    %v1194 = vpack.c.b16 %v1080, %v1078
    %v1195 = vpack.c.b16 %v1081, %v1079
    %v1196 = vpack.c.b16 %v1084, %v1082
    %v1197 = vpack.c.b16 %v1085, %v1083
    %v1198 = vpack.c.b16 %v1088, %v1086
    %v1199 = vpack.c.b16 %v1089, %v1087
    %v1200 = vpack.c.b16 %v1092, %v1090
    %v1201 = vpack.c.b16 %v1093, %v1091
    %v1202 = vpack.c.b16 %v1096, %v1094
    %v1203 = vpack.c.b16 %v1097, %v1095
    %v1204 = vpack.c.b16 %v1100, %v1098
    %v1205 = vpack.c.b16 %v1101, %v1099
    %v1206 = vpack.c.b16 %v1104, %v1102
    %v1207 = vpack.c.b16 %v1105, %v1103
    %v1208 = vpack.c.b16 %v1108, %v1106
    %v1209 = vpack.c.b16 %v1109, %v1107
    %v1210 = vpack.c.b16 %v1112, %v1110
    %v1211 = vpack.c.b16 %v1113, %v1111
    %v1212 = vpack.c.b16 %v1116, %v1114
    %v1213 = vpack.c.b16 %v1117, %v1115
    %1310 = vmatprep.subr.bf16.mxu0 %v1133
    %1311 = vmatpush1.bf16.msra.mxu0 %v1132
    %1312 = vmatprep.subr.bf16.mxu0 %v1131
    %1313 = vmatpush1.bf16.msra.mxu0 %v1130
    %1314 = vmatprep.subr.bf16.mxu0 %v1129
    %1315 = vmatpush1.bf16.msra.mxu0 %v1128
    %1316 = vmatprep.subr.bf16.mxu0 %v1127
    %1317 = vmatpush1.bf16.msra.mxu0 %v1126
    %1318 = vmatprep.subr.bf16.mxu0 %v1125
    %1319 = vmatpush1.bf16.msra.mxu0 %v1124
    %1320 = vmatprep.subr.bf16.mxu0 %v1123
    %1321 = vmatpush1.bf16.msra.mxu0 %v1122
    %1322 = vmatprep.subr.bf16.mxu0 %v1121
    %1323 = vmatpush1.bf16.msra.mxu0 %v1120
    %1324 = vmatprep.subr.bf16.mxu0 %v1119
    %1325 = vmatpush1.bf16.msra.mxu0 %v1118
    %1326 = vmatprep.subr.bf16.mxu0 %v1149
    %1327 = vmatpush2.bf16.msra.mxu0 %v1148
    %1328 = vmatprep.subr.bf16.mxu0 %v1147
    %1329 = vmatpush2.bf16.msra.mxu0 %v1146
    %1330 = vmatprep.subr.bf16.mxu0 %v1145
    %1331 = vmatpush2.bf16.msra.mxu0 %v1144
    %1332 = vmatprep.subr.bf16.mxu0 %v1143
    %1333 = vmatpush2.bf16.msra.mxu0 %v1142
    %1334 = vmatprep.subr.bf16.mxu0 %v1141
    %1335 = vmatpush2.bf16.msra.mxu0 %v1140
    %1336 = vmatprep.subr.bf16.mxu0 %v1139
    %1337 = vmatpush2.bf16.msra.mxu0 %v1138
    %1338 = vmatprep.subr.bf16.mxu0 %v1137
    %1339 = vmatpush2.bf16.msra.mxu0 %v1136
    %1340 = vmatprep.subr.bf16.mxu0 %v1135
    %1341 = vmatpush2.bf16.msra.mxu0 %v1134
    %1342 = vmatprep.mubr.bf16.mxu0 %v29
    %1343 = vmatmul.mubr.bf16.gmra.mxu0 %v28
    %v1344 = vpop.f32.mrf.mxu0
    %v1345 = vadd.f32 0.0, %v1344
    %v1346 = vpop.f32.mrf.mxu0
    %v1347 = vadd.f32 0.0, %v1346
    %v1348 = vpop.f32.mrf.mxu0
    %v1349 = vpop.f32.mrf.mxu0
    %1350 = vdwg.mxu0
    %1351 = vmatprep.subr.bf16.mxu0 %v1165
    %1352 = vmatpush1.bf16.msra.mxu0 %v1164
    %1353 = vmatprep.subr.bf16.mxu0 %v1163
    %1354 = vmatpush1.bf16.msra.mxu0 %v1162
    %1355 = vmatprep.subr.bf16.mxu0 %v1161
    %1356 = vmatpush1.bf16.msra.mxu0 %v1160
    %1357 = vmatprep.subr.bf16.mxu0 %v1159
    %1358 = vmatpush1.bf16.msra.mxu0 %v1158
    %1359 = vmatprep.subr.bf16.mxu0 %v1157
    %1360 = vmatpush1.bf16.msra.mxu0 %v1156
    %1361 = vmatprep.subr.bf16.mxu0 %v1155
    %1362 = vmatpush1.bf16.msra.mxu0 %v1154
    %1363 = vmatprep.subr.bf16.mxu0 %v1153
    %1364 = vmatpush1.bf16.msra.mxu0 %v1152
    %1365 = vmatprep.subr.bf16.mxu0 %v1151
    %1366 = vmatpush1.bf16.msra.mxu0 %v1150
    %1367 = vmatprep.subr.bf16.mxu0 %v1181
    %1368 = vmatpush2.bf16.msra.mxu0 %v1180
    %1369 = vmatprep.subr.bf16.mxu0 %v1179
    %1370 = vmatpush2.bf16.msra.mxu0 %v1178
    %1371 = vmatprep.subr.bf16.mxu0 %v1177
    %1372 = vmatpush2.bf16.msra.mxu0 %v1176
    %1373 = vmatprep.subr.bf16.mxu0 %v1175
    %1374 = vmatpush2.bf16.msra.mxu0 %v1174
    %1375 = vmatprep.subr.bf16.mxu0 %v1173
    %1376 = vmatpush2.bf16.msra.mxu0 %v1172
    %1377 = vmatprep.subr.bf16.mxu0 %v1171
    %1378 = vmatpush2.bf16.msra.mxu0 %v1170
    %1379 = vmatprep.subr.bf16.mxu0 %v1169
    %1380 = vmatpush2.bf16.msra.mxu0 %v1168
    %1381 = vmatprep.subr.bf16.mxu0 %v1167
    %1382 = vmatpush2.bf16.msra.mxu0 %v1166
    %1383 = vmatprep.mubr.bf16.mxu0 %v31
    %1384 = vmatmul.mubr.bf16.gmra.mxu0 %v30
    %v1385 = vpop.f32.mrf.mxu0
    %v1386 = vadd.f32 %v1345, %v1385
    %v1387 = vpop.f32.mrf.mxu0
    %v1388 = vadd.f32 %v1347, %v1387
    %v1389 = vpop.f32.mrf.mxu0
    %v1390 = vpop.f32.mrf.mxu0
    %1391 = vdwg.mxu0
    %1392 = vmatprep.subr.bf16.mxu0 %v1197
    %1393 = vmatpush1.bf16.msra.mxu0 %v1196
    %1394 = vmatprep.subr.bf16.mxu0 %v1195
    %1395 = vmatpush1.bf16.msra.mxu0 %v1194
    %1396 = vmatprep.subr.bf16.mxu0 %v1193
    %1397 = vmatpush1.bf16.msra.mxu0 %v1192
    %1398 = vmatprep.subr.bf16.mxu0 %v1191
    %1399 = vmatpush1.bf16.msra.mxu0 %v1190
    %1400 = vmatprep.subr.bf16.mxu0 %v1189
    %1401 = vmatpush1.bf16.msra.mxu0 %v1188
    %1402 = vmatprep.subr.bf16.mxu0 %v1187
    %1403 = vmatpush1.bf16.msra.mxu0 %v1186
    %1404 = vmatprep.subr.bf16.mxu0 %v1185
    %1405 = vmatpush1.bf16.msra.mxu0 %v1184
    %1406 = vmatprep.subr.bf16.mxu0 %v1183
    %1407 = vmatpush1.bf16.msra.mxu0 %v1182
    %1408 = vmatprep.subr.bf16.mxu0 %v1213
    %1409 = vmatpush2.bf16.msra.mxu0 %v1212
    %1410 = vmatprep.subr.bf16.mxu0 %v1211
    %1411 = vmatpush2.bf16.msra.mxu0 %v1210
    %1412 = vmatprep.subr.bf16.mxu0 %v1209
    %1413 = vmatpush2.bf16.msra.mxu0 %v1208
    %1414 = vmatprep.subr.bf16.mxu0 %v1207
    %1415 = vmatpush2.bf16.msra.mxu0 %v1206
    %1416 = vmatprep.subr.bf16.mxu0 %v1205
    %1417 = vmatpush2.bf16.msra.mxu0 %v1204
    %1418 = vmatprep.subr.bf16.mxu0 %v1203
    %1419 = vmatpush2.bf16.msra.mxu0 %v1202
    %1420 = vmatprep.subr.bf16.mxu0 %v1201
    %1421 = vmatpush2.bf16.msra.mxu0 %v1200
    %1422 = vmatprep.subr.bf16.mxu0 %v1199
    %1423 = vmatpush2.bf16.msra.mxu0 %v1198
    %1424 = vmatprep.mubr.bf16.mxu0 %v33
    %1425 = vmatmul.mubr.bf16.gmra.mxu0 %v32
    %v1426 = vpop.f32.mrf.mxu0
    %v1427 = vadd.f32 %v1386, %v1426
    %v1428 = vpop.f32.mrf.mxu0
    %v1429 = vadd.f32 %v1388, %v1428
    %v1430 = vpop.f32.mrf.mxu0
    %v1431 = vpop.f32.mrf.mxu0
    %1432 = vdwg.mxu0
    %v1433 = vmax.f32 %v727, %v1427
    %v1434 = vmax.f32 %v729, %v1429
    %s1435 = scalar_lea.vmem %s1, 1536
    %v1436 = vld [vmem:[%s1435] sm:$0xff]
    %v1437 = vld [vmem:[%s1435 + $0x8] sm:$0xff]
    %v1438 = vld [vmem:[%s1435 + $0x10] sm:$0xff]
    %v1439 = vld [vmem:[%s1435 + $0x18] sm:$0xff]
    %v1440 = vld [vmem:[%s1435 + $0x20] sm:$0xff]
    %v1441 = vld [vmem:[%s1435 + $0x28] sm:$0xff]
    %v1442 = vld [vmem:[%s1435 + $0x30] sm:$0xff]
    %v1443 = vld [vmem:[%s1435 + $0x38] sm:$0xff]
    %v1444 = vld [vmem:[%s1435 + $0x40] sm:$0xff]
    %v1445 = vld [vmem:[%s1435 + $0x48] sm:$0xff]
    %v1446 = vld [vmem:[%s1435 + $0x50] sm:$0xff]
    %v1447 = vld [vmem:[%s1435 + $0x58] sm:$0xff]
    %v1448 = vld [vmem:[%s1435 + $0x60] sm:$0xff]
    %v1449 = vld [vmem:[%s1435 + $0x68] sm:$0xff]
    %v1450 = vld [vmem:[%s1435 + $0x70] sm:$0xff]
    %v1451 = vld [vmem:[%s1435 + $0x78] sm:$0xff]
    %v1452 = vld [vmem:[%s1435 + $0x80] sm:$0xff]
    %v1453 = vld [vmem:[%s1435 + $0x88] sm:$0xff]
    %v1454 = vld [vmem:[%s1435 + $0x90] sm:$0xff]
    %v1455 = vld [vmem:[%s1435 + $0x98] sm:$0xff]
    %v1456 = vld [vmem:[%s1435 + $0xa0] sm:$0xff]
    %v1457 = vld [vmem:[%s1435 + $0xa8] sm:$0xff]
    %v1458 = vld [vmem:[%s1435 + $0xb0] sm:$0xff]
    %v1459 = vld [vmem:[%s1435 + $0xb8] sm:$0xff]
    %v1460 = vld [vmem:[%s1435 + $0xc0] sm:$0xff]
    %v1461 = vld [vmem:[%s1435 + $0xc8] sm:$0xff]
    %v1462 = vld [vmem:[%s1435 + $0xd0] sm:$0xff]
    %v1463 = vld [vmem:[%s1435 + $0xd8] sm:$0xff]
    %v1464 = vld [vmem:[%s1435 + $0xe0] sm:$0xff]
    %v1465 = vld [vmem:[%s1435 + $0xe8] sm:$0xff]
    %v1466 = vld [vmem:[%s1435 + $0xf0] sm:$0xff]
    %v1467 = vld [vmem:[%s1435 + $0xf8] sm:$0xff]
    %v1468 = vld [vmem:[%s1435 + $0x100] sm:$0xff]
    %v1469 = vld [vmem:[%s1435 + $0x108] sm:$0xff]
    %v1470 = vld [vmem:[%s1435 + $0x110] sm:$0xff]
    %v1471 = vld [vmem:[%s1435 + $0x118] sm:$0xff]
    %v1472 = vld [vmem:[%s1435 + $0x120] sm:$0xff]
    %v1473 = vld [vmem:[%s1435 + $0x128] sm:$0xff]
    %v1474 = vld [vmem:[%s1435 + $0x130] sm:$0xff]
    %v1475 = vld [vmem:[%s1435 + $0x138] sm:$0xff]
    %v1476 = vld [vmem:[%s1435 + $0x140] sm:$0xff]
    %v1477 = vld [vmem:[%s1435 + $0x148] sm:$0xff]
    %v1478 = vld [vmem:[%s1435 + $0x150] sm:$0xff]
    %v1479 = vld [vmem:[%s1435 + $0x158] sm:$0xff]
    %v1480 = vld [vmem:[%s1435 + $0x160] sm:$0xff]
    %v1481 = vld [vmem:[%s1435 + $0x168] sm:$0xff]
    %v1482 = vld [vmem:[%s1435 + $0x170] sm:$0xff]
    %v1483 = vld [vmem:[%s1435 + $0x178] sm:$0xff]
    %v1484 = vld [vmem:[%s1435 + $0x180] sm:$0xff]
    %v1485 = vld [vmem:[%s1435 + $0x188] sm:$0xff]
    %v1486 = vld [vmem:[%s1435 + $0x190] sm:$0xff]
    %v1487 = vld [vmem:[%s1435 + $0x198] sm:$0xff]
    %v1488 = vld [vmem:[%s1435 + $0x1a0] sm:$0xff]
    %v1489 = vld [vmem:[%s1435 + $0x1a8] sm:$0xff]
    %v1490 = vld [vmem:[%s1435 + $0x1b0] sm:$0xff]
    %v1491 = vld [vmem:[%s1435 + $0x1b8] sm:$0xff]
    %v1492 = vld [vmem:[%s1435 + $0x1c0] sm:$0xff]
    %v1493 = vld [vmem:[%s1435 + $0x1c8] sm:$0xff]
    %v1494 = vld [vmem:[%s1435 + $0x1d0] sm:$0xff]
    %v1495 = vld [vmem:[%s1435 + $0x1d8] sm:$0xff]
    %v1496 = vld [vmem:[%s1435 + $0x1e0] sm:$0xff]
    %v1497 = vld [vmem:[%s1435 + $0x1e8] sm:$0xff]
    %v1498 = vld [vmem:[%s1435 + $0x1f0] sm:$0xff]
    %v1499 = vld [vmem:[%s1435 + $0x1f8] sm:$0xff]
    %v1500 = vld [vmem:[%s1435 + $0x200] sm:$0xff]
    %v1501 = vld [vmem:[%s1435 + $0x208] sm:$0xff]
    %v1502 = vld [vmem:[%s1435 + $0x210] sm:$0xff]
    %v1503 = vld [vmem:[%s1435 + $0x218] sm:$0xff]
    %v1504 = vld [vmem:[%s1435 + $0x220] sm:$0xff]
    %v1505 = vld [vmem:[%s1435 + $0x228] sm:$0xff]
    %v1506 = vld [vmem:[%s1435 + $0x230] sm:$0xff]
    %v1507 = vld [vmem:[%s1435 + $0x238] sm:$0xff]
    %v1508 = vld [vmem:[%s1435 + $0x240] sm:$0xff]
    %v1509 = vld [vmem:[%s1435 + $0x248] sm:$0xff]
    %v1510 = vld [vmem:[%s1435 + $0x250] sm:$0xff]
    %v1511 = vld [vmem:[%s1435 + $0x258] sm:$0xff]
    %v1512 = vld [vmem:[%s1435 + $0x260] sm:$0xff]
    %v1513 = vld [vmem:[%s1435 + $0x268] sm:$0xff]
    %v1514 = vld [vmem:[%s1435 + $0x270] sm:$0xff]
    %v1515 = vld [vmem:[%s1435 + $0x278] sm:$0xff]
    %v1516 = vld [vmem:[%s1435 + $0x280] sm:$0xff]
    %v1517 = vld [vmem:[%s1435 + $0x288] sm:$0xff]
    %v1518 = vld [vmem:[%s1435 + $0x290] sm:$0xff]
    %v1519 = vld [vmem:[%s1435 + $0x298] sm:$0xff]
    %v1520 = vld [vmem:[%s1435 + $0x2a0] sm:$0xff]
    %v1521 = vld [vmem:[%s1435 + $0x2a8] sm:$0xff]
    %v1522 = vld [vmem:[%s1435 + $0x2b0] sm:$0xff]
    %v1523 = vld [vmem:[%s1435 + $0x2b8] sm:$0xff]
    %v1524 = vld [vmem:[%s1435 + $0x2c0] sm:$0xff]
    %v1525 = vld [vmem:[%s1435 + $0x2c8] sm:$0xff]
    %v1526 = vld [vmem:[%s1435 + $0x2d0] sm:$0xff]
    %v1527 = vld [vmem:[%s1435 + $0x2d8] sm:$0xff]
    %v1528 = vld [vmem:[%s1435 + $0x2e0] sm:$0xff]
    %v1529 = vld [vmem:[%s1435 + $0x2e8] sm:$0xff]
    %v1530 = vld [vmem:[%s1435 + $0x2f0] sm:$0xff]
    %v1531 = vld [vmem:[%s1435 + $0x2f8] sm:$0xff]
    %v1628 = vunpack.c.l.b16 %v1436
    %v1629 = vunpack.c.h.b16 %v1436
    %v1630 = vunpack.c.l.b16 %v1437
    %v1631 = vunpack.c.h.b16 %v1437
    %v1632 = vunpack.c.l.b16 %v1438
    %v1633 = vunpack.c.h.b16 %v1438
    %v1634 = vunpack.c.l.b16 %v1439
    %v1635 = vunpack.c.h.b16 %v1439
    %v1636 = vunpack.c.l.b16 %v1440
    %v1637 = vunpack.c.h.b16 %v1440
    %v1638 = vunpack.c.l.b16 %v1441
    %v1639 = vunpack.c.h.b16 %v1441
    %v1640 = vunpack.c.l.b16 %v1442
    %v1641 = vunpack.c.h.b16 %v1442
    %v1642 = vunpack.c.l.b16 %v1443
    %v1643 = vunpack.c.h.b16 %v1443
    %v1644 = vunpack.c.l.b16 %v1444
    %v1645 = vunpack.c.h.b16 %v1444
    %v1646 = vunpack.c.l.b16 %v1445
    %v1647 = vunpack.c.h.b16 %v1445
    %v1648 = vunpack.c.l.b16 %v1446
    %v1649 = vunpack.c.h.b16 %v1446
    %v1650 = vunpack.c.l.b16 %v1447
    %v1651 = vunpack.c.h.b16 %v1447
    %v1652 = vunpack.c.l.b16 %v1448
    %v1653 = vunpack.c.h.b16 %v1448
    %v1654 = vunpack.c.l.b16 %v1449
    %v1655 = vunpack.c.h.b16 %v1449
    %v1656 = vunpack.c.l.b16 %v1450
    %v1657 = vunpack.c.h.b16 %v1450
    %v1658 = vunpack.c.l.b16 %v1451
    %v1659 = vunpack.c.h.b16 %v1451
    %v1660 = vunpack.c.l.b16 %v1452
    %v1661 = vunpack.c.h.b16 %v1452
    %v1662 = vunpack.c.l.b16 %v1453
    %v1663 = vunpack.c.h.b16 %v1453
    %v1664 = vunpack.c.l.b16 %v1454
    %v1665 = vunpack.c.h.b16 %v1454
    %v1666 = vunpack.c.l.b16 %v1455
    %v1667 = vunpack.c.h.b16 %v1455
    %v1668 = vunpack.c.l.b16 %v1456
    %v1669 = vunpack.c.h.b16 %v1456
    %v1670 = vunpack.c.l.b16 %v1457
    %v1671 = vunpack.c.h.b16 %v1457
    %v1672 = vunpack.c.l.b16 %v1458
    %v1673 = vunpack.c.h.b16 %v1458
    %v1674 = vunpack.c.l.b16 %v1459
    %v1675 = vunpack.c.h.b16 %v1459
    %v1676 = vunpack.c.l.b16 %v1460
    %v1677 = vunpack.c.h.b16 %v1460
    %v1678 = vunpack.c.l.b16 %v1461
    %v1679 = vunpack.c.h.b16 %v1461
    %v1680 = vunpack.c.l.b16 %v1462
    %v1681 = vunpack.c.h.b16 %v1462
    %v1682 = vunpack.c.l.b16 %v1463
    %v1683 = vunpack.c.h.b16 %v1463
    %v1684 = vunpack.c.l.b16 %v1464
    %v1685 = vunpack.c.h.b16 %v1464
    %v1686 = vunpack.c.l.b16 %v1465
    %v1687 = vunpack.c.h.b16 %v1465
    %v1688 = vunpack.c.l.b16 %v1466
    %v1689 = vunpack.c.h.b16 %v1466
    %v1690 = vunpack.c.l.b16 %v1467
    %v1691 = vunpack.c.h.b16 %v1467
    %v1692 = vunpack.c.l.b16 %v1468
    %v1693 = vunpack.c.h.b16 %v1468
    %v1694 = vunpack.c.l.b16 %v1469
    %v1695 = vunpack.c.h.b16 %v1469
    %v1696 = vunpack.c.l.b16 %v1470
    %v1697 = vunpack.c.h.b16 %v1470
    %v1698 = vunpack.c.l.b16 %v1471
    %v1699 = vunpack.c.h.b16 %v1471
    %v1700 = vunpack.c.l.b16 %v1472
    %v1701 = vunpack.c.h.b16 %v1472
    %v1702 = vunpack.c.l.b16 %v1473
    %v1703 = vunpack.c.h.b16 %v1473
    %v1704 = vunpack.c.l.b16 %v1474
    %v1705 = vunpack.c.h.b16 %v1474
    %v1706 = vunpack.c.l.b16 %v1475
    %v1707 = vunpack.c.h.b16 %v1475
    %v1708 = vunpack.c.l.b16 %v1476
    %v1709 = vunpack.c.h.b16 %v1476
    %v1710 = vunpack.c.l.b16 %v1477
    %v1711 = vunpack.c.h.b16 %v1477
    %v1712 = vunpack.c.l.b16 %v1478
    %v1713 = vunpack.c.h.b16 %v1478
    %v1714 = vunpack.c.l.b16 %v1479
    %v1715 = vunpack.c.h.b16 %v1479
    %v1716 = vunpack.c.l.b16 %v1480
    %v1717 = vunpack.c.h.b16 %v1480
    %v1718 = vunpack.c.l.b16 %v1481
    %v1719 = vunpack.c.h.b16 %v1481
    %v1720 = vunpack.c.l.b16 %v1482
    %v1721 = vunpack.c.h.b16 %v1482
    %v1722 = vunpack.c.l.b16 %v1483
    %v1723 = vunpack.c.h.b16 %v1483
    %v1724 = vunpack.c.l.b16 %v1484
    %v1725 = vunpack.c.h.b16 %v1484
    %v1726 = vunpack.c.l.b16 %v1485
    %v1727 = vunpack.c.h.b16 %v1485
    %v1728 = vunpack.c.l.b16 %v1486
    %v1729 = vunpack.c.h.b16 %v1486
    %v1730 = vunpack.c.l.b16 %v1487
    %v1731 = vunpack.c.h.b16 %v1487
    %v1732 = vunpack.c.l.b16 %v1488
    %v1733 = vunpack.c.h.b16 %v1488
    %v1734 = vunpack.c.l.b16 %v1489
    %v1735 = vunpack.c.h.b16 %v1489
    %v1736 = vunpack.c.l.b16 %v1490
    %v1737 = vunpack.c.h.b16 %v1490
    %v1738 = vunpack.c.l.b16 %v1491
    %v1739 = vunpack.c.h.b16 %v1491
    %v1740 = vunpack.c.l.b16 %v1492
    %v1741 = vunpack.c.h.b16 %v1492
    %v1742 = vunpack.c.l.b16 %v1493
    %v1743 = vunpack.c.h.b16 %v1493
    %v1744 = vunpack.c.l.b16 %v1494
    %v1745 = vunpack.c.h.b16 %v1494
    %v1746 = vunpack.c.l.b16 %v1495
    %v1747 = vunpack.c.h.b16 %v1495
    %v1748 = vunpack.c.l.b16 %v1496
    %v1749 = vunpack.c.h.b16 %v1496
    %v1750 = vunpack.c.l.b16 %v1497
    %v1751 = vunpack.c.h.b16 %v1497
    %v1752 = vunpack.c.l.b16 %v1498
    %v1753 = vunpack.c.h.b16 %v1498
    %v1754 = vunpack.c.l.b16 %v1499
    %v1755 = vunpack.c.h.b16 %v1499
    %v1756 = vunpack.c.l.b16 %v1500
    %v1757 = vunpack.c.h.b16 %v1500
    %v1758 = vunpack.c.l.b16 %v1501
    %v1759 = vunpack.c.h.b16 %v1501
    %v1760 = vunpack.c.l.b16 %v1502
    %v1761 = vunpack.c.h.b16 %v1502
    %v1762 = vunpack.c.l.b16 %v1503
    %v1763 = vunpack.c.h.b16 %v1503
    %v1764 = vunpack.c.l.b16 %v1504
    %v1765 = vunpack.c.h.b16 %v1504
    %v1766 = vunpack.c.l.b16 %v1505
    %v1767 = vunpack.c.h.b16 %v1505
    %v1768 = vunpack.c.l.b16 %v1506
    %v1769 = vunpack.c.h.b16 %v1506
    %v1770 = vunpack.c.l.b16 %v1507
    %v1771 = vunpack.c.h.b16 %v1507
    %v1772 = vunpack.c.l.b16 %v1508
    %v1773 = vunpack.c.h.b16 %v1508
    %v1774 = vunpack.c.l.b16 %v1509
    %v1775 = vunpack.c.h.b16 %v1509
    %v1776 = vunpack.c.l.b16 %v1510
    %v1777 = vunpack.c.h.b16 %v1510
    %v1778 = vunpack.c.l.b16 %v1511
    %v1779 = vunpack.c.h.b16 %v1511
    %v1780 = vunpack.c.l.b16 %v1512
    %v1781 = vunpack.c.h.b16 %v1512
    %v1782 = vunpack.c.l.b16 %v1513
    %v1783 = vunpack.c.h.b16 %v1513
    %v1784 = vunpack.c.l.b16 %v1514
    %v1785 = vunpack.c.h.b16 %v1514
    %v1786 = vunpack.c.l.b16 %v1515
    %v1787 = vunpack.c.h.b16 %v1515
    %v1788 = vunpack.c.l.b16 %v1516
    %v1789 = vunpack.c.h.b16 %v1516
    %v1790 = vunpack.c.l.b16 %v1517
    %v1791 = vunpack.c.h.b16 %v1517
    %v1792 = vunpack.c.l.b16 %v1518
    %v1793 = vunpack.c.h.b16 %v1518
    %v1794 = vunpack.c.l.b16 %v1519
    %v1795 = vunpack.c.h.b16 %v1519
    %v1796 = vunpack.c.l.b16 %v1520
    %v1797 = vunpack.c.h.b16 %v1520
    %v1798 = vunpack.c.l.b16 %v1521
    %v1799 = vunpack.c.h.b16 %v1521
    %v1800 = vunpack.c.l.b16 %v1522
    %v1801 = vunpack.c.h.b16 %v1522
    %v1802 = vunpack.c.l.b16 %v1523
    %v1803 = vunpack.c.h.b16 %v1523
    %v1804 = vunpack.c.l.b16 %v1524
    %v1805 = vunpack.c.h.b16 %v1524
    %v1806 = vunpack.c.l.b16 %v1525
    %v1807 = vunpack.c.h.b16 %v1525
    %v1808 = vunpack.c.l.b16 %v1526
    %v1809 = vunpack.c.h.b16 %v1526
    %v1810 = vunpack.c.l.b16 %v1527
    %v1811 = vunpack.c.h.b16 %v1527
    %v1812 = vunpack.c.l.b16 %v1528
    %v1813 = vunpack.c.h.b16 %v1528
    %v1814 = vunpack.c.l.b16 %v1529
    %v1815 = vunpack.c.h.b16 %v1529
    %v1816 = vunpack.c.l.b16 %v1530
    %v1817 = vunpack.c.h.b16 %v1530
    %v1818 = vunpack.c.l.b16 %v1531
    %v1819 = vunpack.c.h.b16 %v1531
    %v1820 = vpack.c.b16 %v1630, %v1628
    %v1821 = vpack.c.b16 %v1631, %v1629
    %v1822 = vpack.c.b16 %v1634, %v1632
    %v1823 = vpack.c.b16 %v1635, %v1633
    %v1824 = vpack.c.b16 %v1638, %v1636
    %v1825 = vpack.c.b16 %v1639, %v1637
    %v1826 = vpack.c.b16 %v1642, %v1640
    %v1827 = vpack.c.b16 %v1643, %v1641
    %v1828 = vpack.c.b16 %v1646, %v1644
    %v1829 = vpack.c.b16 %v1647, %v1645
    %v1830 = vpack.c.b16 %v1650, %v1648
    %v1831 = vpack.c.b16 %v1651, %v1649
    %v1832 = vpack.c.b16 %v1654, %v1652
    %v1833 = vpack.c.b16 %v1655, %v1653
    %v1834 = vpack.c.b16 %v1658, %v1656
    %v1835 = vpack.c.b16 %v1659, %v1657
    %v1836 = vpack.c.b16 %v1662, %v1660
    %v1837 = vpack.c.b16 %v1663, %v1661
    %v1838 = vpack.c.b16 %v1666, %v1664
    %v1839 = vpack.c.b16 %v1667, %v1665
    %v1840 = vpack.c.b16 %v1670, %v1668
    %v1841 = vpack.c.b16 %v1671, %v1669
    %v1842 = vpack.c.b16 %v1674, %v1672
    %v1843 = vpack.c.b16 %v1675, %v1673
    %v1844 = vpack.c.b16 %v1678, %v1676
    %v1845 = vpack.c.b16 %v1679, %v1677
    %v1846 = vpack.c.b16 %v1682, %v1680
    %v1847 = vpack.c.b16 %v1683, %v1681
    %v1848 = vpack.c.b16 %v1686, %v1684
    %v1849 = vpack.c.b16 %v1687, %v1685
    %v1850 = vpack.c.b16 %v1690, %v1688
    %v1851 = vpack.c.b16 %v1691, %v1689
    %v1852 = vpack.c.b16 %v1694, %v1692
    %v1853 = vpack.c.b16 %v1695, %v1693
    %v1854 = vpack.c.b16 %v1698, %v1696
    %v1855 = vpack.c.b16 %v1699, %v1697
    %v1856 = vpack.c.b16 %v1702, %v1700
    %v1857 = vpack.c.b16 %v1703, %v1701
    %v1858 = vpack.c.b16 %v1706, %v1704
    %v1859 = vpack.c.b16 %v1707, %v1705
    %v1860 = vpack.c.b16 %v1710, %v1708
    %v1861 = vpack.c.b16 %v1711, %v1709
    %v1862 = vpack.c.b16 %v1714, %v1712
    %v1863 = vpack.c.b16 %v1715, %v1713
    %v1864 = vpack.c.b16 %v1718, %v1716
    %v1865 = vpack.c.b16 %v1719, %v1717
    %v1866 = vpack.c.b16 %v1722, %v1720
    %v1867 = vpack.c.b16 %v1723, %v1721
    %v1868 = vpack.c.b16 %v1726, %v1724
    %v1869 = vpack.c.b16 %v1727, %v1725
    %v1870 = vpack.c.b16 %v1730, %v1728
    %v1871 = vpack.c.b16 %v1731, %v1729
    %v1872 = vpack.c.b16 %v1734, %v1732
    %v1873 = vpack.c.b16 %v1735, %v1733
    %v1874 = vpack.c.b16 %v1738, %v1736
    %v1875 = vpack.c.b16 %v1739, %v1737
    %v1876 = vpack.c.b16 %v1742, %v1740
    %v1877 = vpack.c.b16 %v1743, %v1741
    %v1878 = vpack.c.b16 %v1746, %v1744
    %v1879 = vpack.c.b16 %v1747, %v1745
    %v1880 = vpack.c.b16 %v1750, %v1748
    %v1881 = vpack.c.b16 %v1751, %v1749
    %v1882 = vpack.c.b16 %v1754, %v1752
    %v1883 = vpack.c.b16 %v1755, %v1753
    %v1884 = vpack.c.b16 %v1758, %v1756
    %v1885 = vpack.c.b16 %v1759, %v1757
    %v1886 = vpack.c.b16 %v1762, %v1760
    %v1887 = vpack.c.b16 %v1763, %v1761
    %v1888 = vpack.c.b16 %v1766, %v1764
    %v1889 = vpack.c.b16 %v1767, %v1765
    %v1890 = vpack.c.b16 %v1770, %v1768
    %v1891 = vpack.c.b16 %v1771, %v1769
    %v1892 = vpack.c.b16 %v1774, %v1772
    %v1893 = vpack.c.b16 %v1775, %v1773
    %v1894 = vpack.c.b16 %v1778, %v1776
    %v1895 = vpack.c.b16 %v1779, %v1777
    %v1896 = vpack.c.b16 %v1782, %v1780
    %v1897 = vpack.c.b16 %v1783, %v1781
    %v1898 = vpack.c.b16 %v1786, %v1784
    %v1899 = vpack.c.b16 %v1787, %v1785
    %v1900 = vpack.c.b16 %v1790, %v1788
    %v1901 = vpack.c.b16 %v1791, %v1789
    %v1902 = vpack.c.b16 %v1794, %v1792
    %v1903 = vpack.c.b16 %v1795, %v1793
    %v1904 = vpack.c.b16 %v1798, %v1796
    %v1905 = vpack.c.b16 %v1799, %v1797
    %v1906 = vpack.c.b16 %v1802, %v1800
    %v1907 = vpack.c.b16 %v1803, %v1801
    %v1908 = vpack.c.b16 %v1806, %v1804
    %v1909 = vpack.c.b16 %v1807, %v1805
    %v1910 = vpack.c.b16 %v1810, %v1808
    %v1911 = vpack.c.b16 %v1811, %v1809
    %v1912 = vpack.c.b16 %v1814, %v1812
    %v1913 = vpack.c.b16 %v1815, %v1813
    %v1914 = vpack.c.b16 %v1818, %v1816
    %v1915 = vpack.c.b16 %v1819, %v1817
    %2012 = vmatprep.subr.bf16.mxu0 %v1835
    %2013 = vmatpush1.bf16.msra.mxu0 %v1834
    %2014 = vmatprep.subr.bf16.mxu0 %v1833
    %2015 = vmatpush1.bf16.msra.mxu0 %v1832
    %2016 = vmatprep.subr.bf16.mxu0 %v1831
    %2017 = vmatpush1.bf16.msra.mxu0 %v1830
    %2018 = vmatprep.subr.bf16.mxu0 %v1829
    %2019 = vmatpush1.bf16.msra.mxu0 %v1828
    %2020 = vmatprep.subr.bf16.mxu0 %v1827
    %2021 = vmatpush1.bf16.msra.mxu0 %v1826
    %2022 = vmatprep.subr.bf16.mxu0 %v1825
    %2023 = vmatpush1.bf16.msra.mxu0 %v1824
    %2024 = vmatprep.subr.bf16.mxu0 %v1823
    %2025 = vmatpush1.bf16.msra.mxu0 %v1822
    %2026 = vmatprep.subr.bf16.mxu0 %v1821
    %2027 = vmatpush1.bf16.msra.mxu0 %v1820
    %2028 = vmatprep.subr.bf16.mxu0 %v1851
    %2029 = vmatpush2.bf16.msra.mxu0 %v1850
    %2030 = vmatprep.subr.bf16.mxu0 %v1849
    %2031 = vmatpush2.bf16.msra.mxu0 %v1848
    %2032 = vmatprep.subr.bf16.mxu0 %v1847
    %2033 = vmatpush2.bf16.msra.mxu0 %v1846
    %2034 = vmatprep.subr.bf16.mxu0 %v1845
    %2035 = vmatpush2.bf16.msra.mxu0 %v1844
    %2036 = vmatprep.subr.bf16.mxu0 %v1843
    %2037 = vmatpush2.bf16.msra.mxu0 %v1842
    %2038 = vmatprep.subr.bf16.mxu0 %v1841
    %2039 = vmatpush2.bf16.msra.mxu0 %v1840
    %2040 = vmatprep.subr.bf16.mxu0 %v1839
    %2041 = vmatpush2.bf16.msra.mxu0 %v1838
    %2042 = vmatprep.subr.bf16.mxu0 %v1837
    %2043 = vmatpush2.bf16.msra.mxu0 %v1836
    %2044 = vmatprep.mubr.bf16.mxu0 %v29
    %2045 = vmatmul.mubr.bf16.gmra.mxu0 %v28
    %v2046 = vpop.f32.mrf.mxu0
    %v2047 = vadd.f32 0.0, %v2046
    %v2048 = vpop.f32.mrf.mxu0
    %v2049 = vadd.f32 0.0, %v2048
    %v2050 = vpop.f32.mrf.mxu0
    %v2051 = vpop.f32.mrf.mxu0
    %2052 = vdwg.mxu0
    %2053 = vmatprep.subr.bf16.mxu0 %v1867
    %2054 = vmatpush1.bf16.msra.mxu0 %v1866
    %2055 = vmatprep.subr.bf16.mxu0 %v1865
    %2056 = vmatpush1.bf16.msra.mxu0 %v1864
    %2057 = vmatprep.subr.bf16.mxu0 %v1863
    %2058 = vmatpush1.bf16.msra.mxu0 %v1862
    %2059 = vmatprep.subr.bf16.mxu0 %v1861
    %2060 = vmatpush1.bf16.msra.mxu0 %v1860
    %2061 = vmatprep.subr.bf16.mxu0 %v1859
    %2062 = vmatpush1.bf16.msra.mxu0 %v1858
    %2063 = vmatprep.subr.bf16.mxu0 %v1857
    %2064 = vmatpush1.bf16.msra.mxu0 %v1856
    %2065 = vmatprep.subr.bf16.mxu0 %v1855
    %2066 = vmatpush1.bf16.msra.mxu0 %v1854
    %2067 = vmatprep.subr.bf16.mxu0 %v1853
    %2068 = vmatpush1.bf16.msra.mxu0 %v1852
    %2069 = vmatprep.subr.bf16.mxu0 %v1883
    %2070 = vmatpush2.bf16.msra.mxu0 %v1882
    %2071 = vmatprep.subr.bf16.mxu0 %v1881
    %2072 = vmatpush2.bf16.msra.mxu0 %v1880
    %2073 = vmatprep.subr.bf16.mxu0 %v1879
    %2074 = vmatpush2.bf16.msra.mxu0 %v1878
    %2075 = vmatprep.subr.bf16.mxu0 %v1877
    %2076 = vmatpush2.bf16.msra.mxu0 %v1876
    %2077 = vmatprep.subr.bf16.mxu0 %v1875
    %2078 = vmatpush2.bf16.msra.mxu0 %v1874
    %2079 = vmatprep.subr.bf16.mxu0 %v1873
    %2080 = vmatpush2.bf16.msra.mxu0 %v1872
    %2081 = vmatprep.subr.bf16.mxu0 %v1871
    %2082 = vmatpush2.bf16.msra.mxu0 %v1870
    %2083 = vmatprep.subr.bf16.mxu0 %v1869
    %2084 = vmatpush2.bf16.msra.mxu0 %v1868
    %2085 = vmatprep.mubr.bf16.mxu0 %v31
    %2086 = vmatmul.mubr.bf16.gmra.mxu0 %v30
    %v2087 = vpop.f32.mrf.mxu0
    %v2088 = vadd.f32 %v2047, %v2087
    %v2089 = vpop.f32.mrf.mxu0
    %v2090 = vadd.f32 %v2049, %v2089
    %v2091 = vpop.f32.mrf.mxu0
    %v2092 = vpop.f32.mrf.mxu0
    %2093 = vdwg.mxu0
    %2094 = vmatprep.subr.bf16.mxu0 %v1899
    %2095 = vmatpush1.bf16.msra.mxu0 %v1898
    %2096 = vmatprep.subr.bf16.mxu0 %v1897
    %2097 = vmatpush1.bf16.msra.mxu0 %v1896
    %2098 = vmatprep.subr.bf16.mxu0 %v1895
    %2099 = vmatpush1.bf16.msra.mxu0 %v1894
    %2100 = vmatprep.subr.bf16.mxu0 %v1893
    %2101 = vmatpush1.bf16.msra.mxu0 %v1892
    %2102 = vmatprep.subr.bf16.mxu0 %v1891
    %2103 = vmatpush1.bf16.msra.mxu0 %v1890
    %2104 = vmatprep.subr.bf16.mxu0 %v1889
    %2105 = vmatpush1.bf16.msra.mxu0 %v1888
    %2106 = vmatprep.subr.bf16.mxu0 %v1887
    %2107 = vmatpush1.bf16.msra.mxu0 %v1886
    %2108 = vmatprep.subr.bf16.mxu0 %v1885
    %2109 = vmatpush1.bf16.msra.mxu0 %v1884
    %2110 = vmatprep.subr.bf16.mxu0 %v1915
    %2111 = vmatpush2.bf16.msra.mxu0 %v1914
    %2112 = vmatprep.subr.bf16.mxu0 %v1913
    %2113 = vmatpush2.bf16.msra.mxu0 %v1912
    %2114 = vmatprep.subr.bf16.mxu0 %v1911
    %2115 = vmatpush2.bf16.msra.mxu0 %v1910
    %2116 = vmatprep.subr.bf16.mxu0 %v1909
    %2117 = vmatpush2.bf16.msra.mxu0 %v1908
    %2118 = vmatprep.subr.bf16.mxu0 %v1907
    %2119 = vmatpush2.bf16.msra.mxu0 %v1906
    %2120 = vmatprep.subr.bf16.mxu0 %v1905
    %2121 = vmatpush2.bf16.msra.mxu0 %v1904
    %2122 = vmatprep.subr.bf16.mxu0 %v1903
    %2123 = vmatpush2.bf16.msra.mxu0 %v1902
    %2124 = vmatprep.subr.bf16.mxu0 %v1901
    %2125 = vmatpush2.bf16.msra.mxu0 %v1900
    %2126 = vmatprep.mubr.bf16.mxu0 %v33
    %2127 = vmatmul.mubr.bf16.gmra.mxu0 %v32
    %v2128 = vpop.f32.mrf.mxu0
    %v2129 = vadd.f32 %v2088, %v2128
    %v2130 = vpop.f32.mrf.mxu0
    %v2131 = vadd.f32 %v2090, %v2130
    %v2132 = vpop.f32.mrf.mxu0
    %v2133 = vpop.f32.mrf.mxu0
    %2134 = vdwg.mxu0
    %v2135 = vmax.f32 %v1433, %v2129
    %v2136 = vmax.f32 %v1434, %v2131
    %s2137 = scalar_lea.vmem %s1, 2304
    %v2138 = vld [vmem:[%s2137] sm:$0xff]
    %v2139 = vld [vmem:[%s2137 + $0x8] sm:$0xff]
    %v2140 = vld [vmem:[%s2137 + $0x10] sm:$0xff]
    %v2141 = vld [vmem:[%s2137 + $0x18] sm:$0xff]
    %v2142 = vld [vmem:[%s2137 + $0x20] sm:$0xff]
    %v2143 = vld [vmem:[%s2137 + $0x28] sm:$0xff]
    %v2144 = vld [vmem:[%s2137 + $0x30] sm:$0xff]
    %v2145 = vld [vmem:[%s2137 + $0x38] sm:$0xff]
    %v2146 = vld [vmem:[%s2137 + $0x40] sm:$0xff]
    %v2147 = vld [vmem:[%s2137 + $0x48] sm:$0xff]
    %v2148 = vld [vmem:[%s2137 + $0x50] sm:$0xff]
    %v2149 = vld [vmem:[%s2137 + $0x58] sm:$0xff]
    %v2150 = vld [vmem:[%s2137 + $0x60] sm:$0xff]
    %v2151 = vld [vmem:[%s2137 + $0x68] sm:$0xff]
    %v2152 = vld [vmem:[%s2137 + $0x70] sm:$0xff]
    %v2153 = vld [vmem:[%s2137 + $0x78] sm:$0xff]
    %v2154 = vld [vmem:[%s2137 + $0x80] sm:$0xff]
    %v2155 = vld [vmem:[%s2137 + $0x88] sm:$0xff]
    %v2156 = vld [vmem:[%s2137 + $0x90] sm:$0xff]
    %v2157 = vld [vmem:[%s2137 + $0x98] sm:$0xff]
    %v2158 = vld [vmem:[%s2137 + $0xa0] sm:$0xff]
    %v2159 = vld [vmem:[%s2137 + $0xa8] sm:$0xff]
    %v2160 = vld [vmem:[%s2137 + $0xb0] sm:$0xff]
    %v2161 = vld [vmem:[%s2137 + $0xb8] sm:$0xff]
    %v2162 = vld [vmem:[%s2137 + $0xc0] sm:$0xff]
    %v2163 = vld [vmem:[%s2137 + $0xc8] sm:$0xff]
    %v2164 = vld [vmem:[%s2137 + $0xd0] sm:$0xff]
    %v2165 = vld [vmem:[%s2137 + $0xd8] sm:$0xff]
    %v2166 = vld [vmem:[%s2137 + $0xe0] sm:$0xff]
    %v2167 = vld [vmem:[%s2137 + $0xe8] sm:$0xff]
    %v2168 = vld [vmem:[%s2137 + $0xf0] sm:$0xff]
    %v2169 = vld [vmem:[%s2137 + $0xf8] sm:$0xff]
    %v2170 = vld [vmem:[%s2137 + $0x100] sm:$0xff]
    %v2171 = vld [vmem:[%s2137 + $0x108] sm:$0xff]
    %v2172 = vld [vmem:[%s2137 + $0x110] sm:$0xff]
    %v2173 = vld [vmem:[%s2137 + $0x118] sm:$0xff]
    %v2174 = vld [vmem:[%s2137 + $0x120] sm:$0xff]
    %v2175 = vld [vmem:[%s2137 + $0x128] sm:$0xff]
    %v2176 = vld [vmem:[%s2137 + $0x130] sm:$0xff]
    %v2177 = vld [vmem:[%s2137 + $0x138] sm:$0xff]
    %v2178 = vld [vmem:[%s2137 + $0x140] sm:$0xff]
    %v2179 = vld [vmem:[%s2137 + $0x148] sm:$0xff]
    %v2180 = vld [vmem:[%s2137 + $0x150] sm:$0xff]
    %v2181 = vld [vmem:[%s2137 + $0x158] sm:$0xff]
    %v2182 = vld [vmem:[%s2137 + $0x160] sm:$0xff]
    %v2183 = vld [vmem:[%s2137 + $0x168] sm:$0xff]
    %v2184 = vld [vmem:[%s2137 + $0x170] sm:$0xff]
    %v2185 = vld [vmem:[%s2137 + $0x178] sm:$0xff]
    %v2186 = vld [vmem:[%s2137 + $0x180] sm:$0xff]
    %v2187 = vld [vmem:[%s2137 + $0x188] sm:$0xff]
    %v2188 = vld [vmem:[%s2137 + $0x190] sm:$0xff]
    %v2189 = vld [vmem:[%s2137 + $0x198] sm:$0xff]
    %v2190 = vld [vmem:[%s2137 + $0x1a0] sm:$0xff]
    %v2191 = vld [vmem:[%s2137 + $0x1a8] sm:$0xff]
    %v2192 = vld [vmem:[%s2137 + $0x1b0] sm:$0xff]
    %v2193 = vld [vmem:[%s2137 + $0x1b8] sm:$0xff]
    %v2194 = vld [vmem:[%s2137 + $0x1c0] sm:$0xff]
    %v2195 = vld [vmem:[%s2137 + $0x1c8] sm:$0xff]
    %v2196 = vld [vmem:[%s2137 + $0x1d0] sm:$0xff]
    %v2197 = vld [vmem:[%s2137 + $0x1d8] sm:$0xff]
    %v2198 = vld [vmem:[%s2137 + $0x1e0] sm:$0xff]
    %v2199 = vld [vmem:[%s2137 + $0x1e8] sm:$0xff]
    %v2200 = vld [vmem:[%s2137 + $0x1f0] sm:$0xff]
    %v2201 = vld [vmem:[%s2137 + $0x1f8] sm:$0xff]
    %v2202 = vld [vmem:[%s2137 + $0x200] sm:$0xff]
    %v2203 = vld [vmem:[%s2137 + $0x208] sm:$0xff]
    %v2204 = vld [vmem:[%s2137 + $0x210] sm:$0xff]
    %v2205 = vld [vmem:[%s2137 + $0x218] sm:$0xff]
    %v2206 = vld [vmem:[%s2137 + $0x220] sm:$0xff]
    %v2207 = vld [vmem:[%s2137 + $0x228] sm:$0xff]
    %v2208 = vld [vmem:[%s2137 + $0x230] sm:$0xff]
    %v2209 = vld [vmem:[%s2137 + $0x238] sm:$0xff]
    %v2210 = vld [vmem:[%s2137 + $0x240] sm:$0xff]
    %v2211 = vld [vmem:[%s2137 + $0x248] sm:$0xff]
    %v2212 = vld [vmem:[%s2137 + $0x250] sm:$0xff]
    %v2213 = vld [vmem:[%s2137 + $0x258] sm:$0xff]
    %v2214 = vld [vmem:[%s2137 + $0x260] sm:$0xff]
    %v2215 = vld [vmem:[%s2137 + $0x268] sm:$0xff]
    %v2216 = vld [vmem:[%s2137 + $0x270] sm:$0xff]
    %v2217 = vld [vmem:[%s2137 + $0x278] sm:$0xff]
    %v2218 = vld [vmem:[%s2137 + $0x280] sm:$0xff]
    %v2219 = vld [vmem:[%s2137 + $0x288] sm:$0xff]
    %v2220 = vld [vmem:[%s2137 + $0x290] sm:$0xff]
    %v2221 = vld [vmem:[%s2137 + $0x298] sm:$0xff]
    %v2222 = vld [vmem:[%s2137 + $0x2a0] sm:$0xff]
    %v2223 = vld [vmem:[%s2137 + $0x2a8] sm:$0xff]
    %v2224 = vld [vmem:[%s2137 + $0x2b0] sm:$0xff]
    %v2225 = vld [vmem:[%s2137 + $0x2b8] sm:$0xff]
    %v2226 = vld [vmem:[%s2137 + $0x2c0] sm:$0xff]
    %v2227 = vld [vmem:[%s2137 + $0x2c8] sm:$0xff]
    %v2228 = vld [vmem:[%s2137 + $0x2d0] sm:$0xff]
    %v2229 = vld [vmem:[%s2137 + $0x2d8] sm:$0xff]
    %v2230 = vld [vmem:[%s2137 + $0x2e0] sm:$0xff]
    %v2231 = vld [vmem:[%s2137 + $0x2e8] sm:$0xff]
    %v2232 = vld [vmem:[%s2137 + $0x2f0] sm:$0xff]
    %v2233 = vld [vmem:[%s2137 + $0x2f8] sm:$0xff]
    %v2330 = vunpack.c.l.b16 %v2138
    %v2331 = vunpack.c.h.b16 %v2138
    %v2332 = vunpack.c.l.b16 %v2139
    %v2333 = vunpack.c.h.b16 %v2139
    %v2334 = vunpack.c.l.b16 %v2140
    %v2335 = vunpack.c.h.b16 %v2140
    %v2336 = vunpack.c.l.b16 %v2141
    %v2337 = vunpack.c.h.b16 %v2141
    %v2338 = vunpack.c.l.b16 %v2142
    %v2339 = vunpack.c.h.b16 %v2142
    %v2340 = vunpack.c.l.b16 %v2143
    %v2341 = vunpack.c.h.b16 %v2143
    %v2342 = vunpack.c.l.b16 %v2144
    %v2343 = vunpack.c.h.b16 %v2144
    %v2344 = vunpack.c.l.b16 %v2145
    %v2345 = vunpack.c.h.b16 %v2145
    %v2346 = vunpack.c.l.b16 %v2146
    %v2347 = vunpack.c.h.b16 %v2146
    %v2348 = vunpack.c.l.b16 %v2147
    %v2349 = vunpack.c.h.b16 %v2147
    %v2350 = vunpack.c.l.b16 %v2148
    %v2351 = vunpack.c.h.b16 %v2148
    %v2352 = vunpack.c.l.b16 %v2149
    %v2353 = vunpack.c.h.b16 %v2149
    %v2354 = vunpack.c.l.b16 %v2150
    %v2355 = vunpack.c.h.b16 %v2150
    %v2356 = vunpack.c.l.b16 %v2151
    %v2357 = vunpack.c.h.b16 %v2151
    %v2358 = vunpack.c.l.b16 %v2152
    %v2359 = vunpack.c.h.b16 %v2152
    %v2360 = vunpack.c.l.b16 %v2153
    %v2361 = vunpack.c.h.b16 %v2153
    %v2362 = vunpack.c.l.b16 %v2154
    %v2363 = vunpack.c.h.b16 %v2154
    %v2364 = vunpack.c.l.b16 %v2155
    %v2365 = vunpack.c.h.b16 %v2155
    %v2366 = vunpack.c.l.b16 %v2156
    %v2367 = vunpack.c.h.b16 %v2156
    %v2368 = vunpack.c.l.b16 %v2157
    %v2369 = vunpack.c.h.b16 %v2157
    %v2370 = vunpack.c.l.b16 %v2158
    %v2371 = vunpack.c.h.b16 %v2158
    %v2372 = vunpack.c.l.b16 %v2159
    %v2373 = vunpack.c.h.b16 %v2159
    %v2374 = vunpack.c.l.b16 %v2160
    %v2375 = vunpack.c.h.b16 %v2160
    %v2376 = vunpack.c.l.b16 %v2161
    %v2377 = vunpack.c.h.b16 %v2161
    %v2378 = vunpack.c.l.b16 %v2162
    %v2379 = vunpack.c.h.b16 %v2162
    %v2380 = vunpack.c.l.b16 %v2163
    %v2381 = vunpack.c.h.b16 %v2163
    %v2382 = vunpack.c.l.b16 %v2164
    %v2383 = vunpack.c.h.b16 %v2164
    %v2384 = vunpack.c.l.b16 %v2165
    %v2385 = vunpack.c.h.b16 %v2165
    %v2386 = vunpack.c.l.b16 %v2166
    %v2387 = vunpack.c.h.b16 %v2166
    %v2388 = vunpack.c.l.b16 %v2167
    %v2389 = vunpack.c.h.b16 %v2167
    %v2390 = vunpack.c.l.b16 %v2168
    %v2391 = vunpack.c.h.b16 %v2168
    %v2392 = vunpack.c.l.b16 %v2169
    %v2393 = vunpack.c.h.b16 %v2169
    %v2394 = vunpack.c.l.b16 %v2170
    %v2395 = vunpack.c.h.b16 %v2170
    %v2396 = vunpack.c.l.b16 %v2171
    %v2397 = vunpack.c.h.b16 %v2171
    %v2398 = vunpack.c.l.b16 %v2172
    %v2399 = vunpack.c.h.b16 %v2172
    %v2400 = vunpack.c.l.b16 %v2173
    %v2401 = vunpack.c.h.b16 %v2173
    %v2402 = vunpack.c.l.b16 %v2174
    %v2403 = vunpack.c.h.b16 %v2174
    %v2404 = vunpack.c.l.b16 %v2175
    %v2405 = vunpack.c.h.b16 %v2175
    %v2406 = vunpack.c.l.b16 %v2176
    %v2407 = vunpack.c.h.b16 %v2176
    %v2408 = vunpack.c.l.b16 %v2177
    %v2409 = vunpack.c.h.b16 %v2177
    %v2410 = vunpack.c.l.b16 %v2178
    %v2411 = vunpack.c.h.b16 %v2178
    %v2412 = vunpack.c.l.b16 %v2179
    %v2413 = vunpack.c.h.b16 %v2179
    %v2414 = vunpack.c.l.b16 %v2180
    %v2415 = vunpack.c.h.b16 %v2180
    %v2416 = vunpack.c.l.b16 %v2181
    %v2417 = vunpack.c.h.b16 %v2181
    %v2418 = vunpack.c.l.b16 %v2182
    %v2419 = vunpack.c.h.b16 %v2182
    %v2420 = vunpack.c.l.b16 %v2183
    %v2421 = vunpack.c.h.b16 %v2183
    %v2422 = vunpack.c.l.b16 %v2184
    %v2423 = vunpack.c.h.b16 %v2184
    %v2424 = vunpack.c.l.b16 %v2185
    %v2425 = vunpack.c.h.b16 %v2185
    %v2426 = vunpack.c.l.b16 %v2186
    %v2427 = vunpack.c.h.b16 %v2186
    %v2428 = vunpack.c.l.b16 %v2187
    %v2429 = vunpack.c.h.b16 %v2187
    %v2430 = vunpack.c.l.b16 %v2188
    %v2431 = vunpack.c.h.b16 %v2188
    %v2432 = vunpack.c.l.b16 %v2189
    %v2433 = vunpack.c.h.b16 %v2189
    %v2434 = vunpack.c.l.b16 %v2190
    %v2435 = vunpack.c.h.b16 %v2190
    %v2436 = vunpack.c.l.b16 %v2191
    %v2437 = vunpack.c.h.b16 %v2191
    %v2438 = vunpack.c.l.b16 %v2192
    %v2439 = vunpack.c.h.b16 %v2192
    %v2440 = vunpack.c.l.b16 %v2193
    %v2441 = vunpack.c.h.b16 %v2193
    %v2442 = vunpack.c.l.b16 %v2194
    %v2443 = vunpack.c.h.b16 %v2194
    %v2444 = vunpack.c.l.b16 %v2195
    %v2445 = vunpack.c.h.b16 %v2195
    %v2446 = vunpack.c.l.b16 %v2196
    %v2447 = vunpack.c.h.b16 %v2196
    %v2448 = vunpack.c.l.b16 %v2197
    %v2449 = vunpack.c.h.b16 %v2197
    %v2450 = vunpack.c.l.b16 %v2198
    %v2451 = vunpack.c.h.b16 %v2198
    %v2452 = vunpack.c.l.b16 %v2199
    %v2453 = vunpack.c.h.b16 %v2199
    %v2454 = vunpack.c.l.b16 %v2200
    %v2455 = vunpack.c.h.b16 %v2200
    %v2456 = vunpack.c.l.b16 %v2201
    %v2457 = vunpack.c.h.b16 %v2201
    %v2458 = vunpack.c.l.b16 %v2202
    %v2459 = vunpack.c.h.b16 %v2202
    %v2460 = vunpack.c.l.b16 %v2203
    %v2461 = vunpack.c.h.b16 %v2203
    %v2462 = vunpack.c.l.b16 %v2204
    %v2463 = vunpack.c.h.b16 %v2204
    %v2464 = vunpack.c.l.b16 %v2205
    %v2465 = vunpack.c.h.b16 %v2205
    %v2466 = vunpack.c.l.b16 %v2206
    %v2467 = vunpack.c.h.b16 %v2206
    %v2468 = vunpack.c.l.b16 %v2207
    %v2469 = vunpack.c.h.b16 %v2207
    %v2470 = vunpack.c.l.b16 %v2208
    %v2471 = vunpack.c.h.b16 %v2208
    %v2472 = vunpack.c.l.b16 %v2209
    %v2473 = vunpack.c.h.b16 %v2209
    %v2474 = vunpack.c.l.b16 %v2210
    %v2475 = vunpack.c.h.b16 %v2210
    %v2476 = vunpack.c.l.b16 %v2211
    %v2477 = vunpack.c.h.b16 %v2211
    %v2478 = vunpack.c.l.b16 %v2212
    %v2479 = vunpack.c.h.b16 %v2212
    %v2480 = vunpack.c.l.b16 %v2213
    %v2481 = vunpack.c.h.b16 %v2213
    %v2482 = vunpack.c.l.b16 %v2214
    %v2483 = vunpack.c.h.b16 %v2214
    %v2484 = vunpack.c.l.b16 %v2215
    %v2485 = vunpack.c.h.b16 %v2215
    %v2486 = vunpack.c.l.b16 %v2216
    %v2487 = vunpack.c.h.b16 %v2216
    %v2488 = vunpack.c.l.b16 %v2217
    %v2489 = vunpack.c.h.b16 %v2217
    %v2490 = vunpack.c.l.b16 %v2218
    %v2491 = vunpack.c.h.b16 %v2218
    %v2492 = vunpack.c.l.b16 %v2219
    %v2493 = vunpack.c.h.b16 %v2219
    %v2494 = vunpack.c.l.b16 %v2220
    %v2495 = vunpack.c.h.b16 %v2220
    %v2496 = vunpack.c.l.b16 %v2221
    %v2497 = vunpack.c.h.b16 %v2221
    %v2498 = vunpack.c.l.b16 %v2222
    %v2499 = vunpack.c.h.b16 %v2222
    %v2500 = vunpack.c.l.b16 %v2223
    %v2501 = vunpack.c.h.b16 %v2223
    %v2502 = vunpack.c.l.b16 %v2224
    %v2503 = vunpack.c.h.b16 %v2224
    %v2504 = vunpack.c.l.b16 %v2225
    %v2505 = vunpack.c.h.b16 %v2225
    %v2506 = vunpack.c.l.b16 %v2226
    %v2507 = vunpack.c.h.b16 %v2226
    %v2508 = vunpack.c.l.b16 %v2227
    %v2509 = vunpack.c.h.b16 %v2227
    %v2510 = vunpack.c.l.b16 %v2228
    %v2511 = vunpack.c.h.b16 %v2228
    %v2512 = vunpack.c.l.b16 %v2229
    %v2513 = vunpack.c.h.b16 %v2229
    %v2514 = vunpack.c.l.b16 %v2230
    %v2515 = vunpack.c.h.b16 %v2230
    %v2516 = vunpack.c.l.b16 %v2231
    %v2517 = vunpack.c.h.b16 %v2231
    %v2518 = vunpack.c.l.b16 %v2232
    %v2519 = vunpack.c.h.b16 %v2232
    %v2520 = vunpack.c.l.b16 %v2233
    %v2521 = vunpack.c.h.b16 %v2233
    %v2522 = vpack.c.b16 %v2332, %v2330
    %v2523 = vpack.c.b16 %v2333, %v2331
    %v2524 = vpack.c.b16 %v2336, %v2334
    %v2525 = vpack.c.b16 %v2337, %v2335
    %v2526 = vpack.c.b16 %v2340, %v2338
    %v2527 = vpack.c.b16 %v2341, %v2339
    %v2528 = vpack.c.b16 %v2344, %v2342
    %v2529 = vpack.c.b16 %v2345, %v2343
    %v2530 = vpack.c.b16 %v2348, %v2346
    %v2531 = vpack.c.b16 %v2349, %v2347
    %v2532 = vpack.c.b16 %v2352, %v2350
    %v2533 = vpack.c.b16 %v2353, %v2351
    %v2534 = vpack.c.b16 %v2356, %v2354
    %v2535 = vpack.c.b16 %v2357, %v2355
    %v2536 = vpack.c.b16 %v2360, %v2358
    %v2537 = vpack.c.b16 %v2361, %v2359
    %v2538 = vpack.c.b16 %v2364, %v2362
    %v2539 = vpack.c.b16 %v2365, %v2363
    %v2540 = vpack.c.b16 %v2368, %v2366
    %v2541 = vpack.c.b16 %v2369, %v2367
    %v2542 = vpack.c.b16 %v2372, %v2370
    %v2543 = vpack.c.b16 %v2373, %v2371
    %v2544 = vpack.c.b16 %v2376, %v2374
    %v2545 = vpack.c.b16 %v2377, %v2375
    %v2546 = vpack.c.b16 %v2380, %v2378
    %v2547 = vpack.c.b16 %v2381, %v2379
    %v2548 = vpack.c.b16 %v2384, %v2382
    %v2549 = vpack.c.b16 %v2385, %v2383
    %v2550 = vpack.c.b16 %v2388, %v2386
    %v2551 = vpack.c.b16 %v2389, %v2387
    %v2552 = vpack.c.b16 %v2392, %v2390
    %v2553 = vpack.c.b16 %v2393, %v2391
    %v2554 = vpack.c.b16 %v2396, %v2394
    %v2555 = vpack.c.b16 %v2397, %v2395
    %v2556 = vpack.c.b16 %v2400, %v2398
    %v2557 = vpack.c.b16 %v2401, %v2399
    %v2558 = vpack.c.b16 %v2404, %v2402
    %v2559 = vpack.c.b16 %v2405, %v2403
    %v2560 = vpack.c.b16 %v2408, %v2406
    %v2561 = vpack.c.b16 %v2409, %v2407
    %v2562 = vpack.c.b16 %v2412, %v2410
    %v2563 = vpack.c.b16 %v2413, %v2411
    %v2564 = vpack.c.b16 %v2416, %v2414
    %v2565 = vpack.c.b16 %v2417, %v2415
    %v2566 = vpack.c.b16 %v2420, %v2418
    %v2567 = vpack.c.b16 %v2421, %v2419
    %v2568 = vpack.c.b16 %v2424, %v2422
    %v2569 = vpack.c.b16 %v2425, %v2423
    %v2570 = vpack.c.b16 %v2428, %v2426
    %v2571 = vpack.c.b16 %v2429, %v2427
    %v2572 = vpack.c.b16 %v2432, %v2430
    %v2573 = vpack.c.b16 %v2433, %v2431
    %v2574 = vpack.c.b16 %v2436, %v2434
    %v2575 = vpack.c.b16 %v2437, %v2435
    %v2576 = vpack.c.b16 %v2440, %v2438
    %v2577 = vpack.c.b16 %v2441, %v2439
    %v2578 = vpack.c.b16 %v2444, %v2442
    %v2579 = vpack.c.b16 %v2445, %v2443
    %v2580 = vpack.c.b16 %v2448, %v2446
    %v2581 = vpack.c.b16 %v2449, %v2447
    %v2582 = vpack.c.b16 %v2452, %v2450
    %v2583 = vpack.c.b16 %v2453, %v2451
    %v2584 = vpack.c.b16 %v2456, %v2454
    %v2585 = vpack.c.b16 %v2457, %v2455
    %v2586 = vpack.c.b16 %v2460, %v2458
    %v2587 = vpack.c.b16 %v2461, %v2459
    %v2588 = vpack.c.b16 %v2464, %v2462
    %v2589 = vpack.c.b16 %v2465, %v2463
    %v2590 = vpack.c.b16 %v2468, %v2466
    %v2591 = vpack.c.b16 %v2469, %v2467
    %v2592 = vpack.c.b16 %v2472, %v2470
    %v2593 = vpack.c.b16 %v2473, %v2471
    %v2594 = vpack.c.b16 %v2476, %v2474
    %v2595 = vpack.c.b16 %v2477, %v2475
    %v2596 = vpack.c.b16 %v2480, %v2478
    %v2597 = vpack.c.b16 %v2481, %v2479
    %v2598 = vpack.c.b16 %v2484, %v2482
    %v2599 = vpack.c.b16 %v2485, %v2483
    %v2600 = vpack.c.b16 %v2488, %v2486
    %v2601 = vpack.c.b16 %v2489, %v2487
    %v2602 = vpack.c.b16 %v2492, %v2490
    %v2603 = vpack.c.b16 %v2493, %v2491
    %v2604 = vpack.c.b16 %v2496, %v2494
    %v2605 = vpack.c.b16 %v2497, %v2495
    %v2606 = vpack.c.b16 %v2500, %v2498
    %v2607 = vpack.c.b16 %v2501, %v2499
    %v2608 = vpack.c.b16 %v2504, %v2502
    %v2609 = vpack.c.b16 %v2505, %v2503
    %v2610 = vpack.c.b16 %v2508, %v2506
    %v2611 = vpack.c.b16 %v2509, %v2507
    %v2612 = vpack.c.b16 %v2512, %v2510
    %v2613 = vpack.c.b16 %v2513, %v2511
    %v2614 = vpack.c.b16 %v2516, %v2514
    %v2615 = vpack.c.b16 %v2517, %v2515
    %v2616 = vpack.c.b16 %v2520, %v2518
    %v2617 = vpack.c.b16 %v2521, %v2519
    %2714 = vmatprep.subr.bf16.mxu0 %v2537
    %2715 = vmatpush1.bf16.msra.mxu0 %v2536
    %2716 = vmatprep.subr.bf16.mxu0 %v2535
    %2717 = vmatpush1.bf16.msra.mxu0 %v2534
    %2718 = vmatprep.subr.bf16.mxu0 %v2533
    %2719 = vmatpush1.bf16.msra.mxu0 %v2532
    %2720 = vmatprep.subr.bf16.mxu0 %v2531
    %2721 = vmatpush1.bf16.msra.mxu0 %v2530
    %2722 = vmatprep.subr.bf16.mxu0 %v2529
    %2723 = vmatpush1.bf16.msra.mxu0 %v2528
    %2724 = vmatprep.subr.bf16.mxu0 %v2527
    %2725 = vmatpush1.bf16.msra.mxu0 %v2526
    %2726 = vmatprep.subr.bf16.mxu0 %v2525
    %2727 = vmatpush1.bf16.msra.mxu0 %v2524
    %2728 = vmatprep.subr.bf16.mxu0 %v2523
    %2729 = vmatpush1.bf16.msra.mxu0 %v2522
    %2730 = vmatprep.subr.bf16.mxu0 %v2553
    %2731 = vmatpush2.bf16.msra.mxu0 %v2552
    %2732 = vmatprep.subr.bf16.mxu0 %v2551
    %2733 = vmatpush2.bf16.msra.mxu0 %v2550
    %2734 = vmatprep.subr.bf16.mxu0 %v2549
    %2735 = vmatpush2.bf16.msra.mxu0 %v2548
    %2736 = vmatprep.subr.bf16.mxu0 %v2547
    %2737 = vmatpush2.bf16.msra.mxu0 %v2546
    %2738 = vmatprep.subr.bf16.mxu0 %v2545
    %2739 = vmatpush2.bf16.msra.mxu0 %v2544
    %2740 = vmatprep.subr.bf16.mxu0 %v2543
    %2741 = vmatpush2.bf16.msra.mxu0 %v2542
    %2742 = vmatprep.subr.bf16.mxu0 %v2541
    %2743 = vmatpush2.bf16.msra.mxu0 %v2540
    %2744 = vmatprep.subr.bf16.mxu0 %v2539
    %2745 = vmatpush2.bf16.msra.mxu0 %v2538
    %2746 = vmatprep.mubr.bf16.mxu0 %v29
    %2747 = vmatmul.mubr.bf16.gmra.mxu0 %v28
    %v2748 = vpop.f32.mrf.mxu0
    %v2749 = vadd.f32 0.0, %v2748
    %v2750 = vpop.f32.mrf.mxu0
    %v2751 = vadd.f32 0.0, %v2750
    %v2752 = vpop.f32.mrf.mxu0
    %v2753 = vpop.f32.mrf.mxu0
    %2754 = vdwg.mxu0
    %2755 = vmatprep.subr.bf16.mxu0 %v2569
    %2756 = vmatpush1.bf16.msra.mxu0 %v2568
    %2757 = vmatprep.subr.bf16.mxu0 %v2567
    %2758 = vmatpush1.bf16.msra.mxu0 %v2566
    %2759 = vmatprep.subr.bf16.mxu0 %v2565
    %2760 = vmatpush1.bf16.msra.mxu0 %v2564
    %2761 = vmatprep.subr.bf16.mxu0 %v2563
    %2762 = vmatpush1.bf16.msra.mxu0 %v2562
    %2763 = vmatprep.subr.bf16.mxu0 %v2561
    %2764 = vmatpush1.bf16.msra.mxu0 %v2560
    %2765 = vmatprep.subr.bf16.mxu0 %v2559
    %2766 = vmatpush1.bf16.msra.mxu0 %v2558
    %2767 = vmatprep.subr.bf16.mxu0 %v2557
    %2768 = vmatpush1.bf16.msra.mxu0 %v2556
    %2769 = vmatprep.subr.bf16.mxu0 %v2555
    %2770 = vmatpush1.bf16.msra.mxu0 %v2554
    %2771 = vmatprep.subr.bf16.mxu0 %v2585
    %2772 = vmatpush2.bf16.msra.mxu0 %v2584
    %2773 = vmatprep.subr.bf16.mxu0 %v2583
    %2774 = vmatpush2.bf16.msra.mxu0 %v2582
    %2775 = vmatprep.subr.bf16.mxu0 %v2581
    %2776 = vmatpush2.bf16.msra.mxu0 %v2580
    %2777 = vmatprep.subr.bf16.mxu0 %v2579
    %2778 = vmatpush2.bf16.msra.mxu0 %v2578
    %2779 = vmatprep.subr.bf16.mxu0 %v2577
    %2780 = vmatpush2.bf16.msra.mxu0 %v2576
    %2781 = vmatprep.subr.bf16.mxu0 %v2575
    %2782 = vmatpush2.bf16.msra.mxu0 %v2574
    %2783 = vmatprep.subr.bf16.mxu0 %v2573
    %2784 = vmatpush2.bf16.msra.mxu0 %v2572
    %2785 = vmatprep.subr.bf16.mxu0 %v2571
    %2786 = vmatpush2.bf16.msra.mxu0 %v2570
    %2787 = vmatprep.mubr.bf16.mxu0 %v31
    %2788 = vmatmul.mubr.bf16.gmra.mxu0 %v30
    %v2789 = vpop.f32.mrf.mxu0
    %v2790 = vadd.f32 %v2749, %v2789
    %v2791 = vpop.f32.mrf.mxu0
    %v2792 = vadd.f32 %v2751, %v2791
    %v2793 = vpop.f32.mrf.mxu0
    %v2794 = vpop.f32.mrf.mxu0
    %2795 = vdwg.mxu0
    %2796 = vmatprep.subr.bf16.mxu0 %v2601
    %2797 = vmatpush1.bf16.msra.mxu0 %v2600
    %2798 = vmatprep.subr.bf16.mxu0 %v2599
    %2799 = vmatpush1.bf16.msra.mxu0 %v2598
    %2800 = vmatprep.subr.bf16.mxu0 %v2597
    %2801 = vmatpush1.bf16.msra.mxu0 %v2596
    %2802 = vmatprep.subr.bf16.mxu0 %v2595
    %2803 = vmatpush1.bf16.msra.mxu0 %v2594
    %2804 = vmatprep.subr.bf16.mxu0 %v2593
    %2805 = vmatpush1.bf16.msra.mxu0 %v2592
    %2806 = vmatprep.subr.bf16.mxu0 %v2591
    %2807 = vmatpush1.bf16.msra.mxu0 %v2590
    %2808 = vmatprep.subr.bf16.mxu0 %v2589
    %2809 = vmatpush1.bf16.msra.mxu0 %v2588
    %2810 = vmatprep.subr.bf16.mxu0 %v2587
    %2811 = vmatpush1.bf16.msra.mxu0 %v2586
    %2812 = vmatprep.subr.bf16.mxu0 %v2617
    %2813 = vmatpush2.bf16.msra.mxu0 %v2616
    %2814 = vmatprep.subr.bf16.mxu0 %v2615
    %2815 = vmatpush2.bf16.msra.mxu0 %v2614
    %2816 = vmatprep.subr.bf16.mxu0 %v2613
    %2817 = vmatpush2.bf16.msra.mxu0 %v2612
    %2818 = vmatprep.subr.bf16.mxu0 %v2611
    %2819 = vmatpush2.bf16.msra.mxu0 %v2610
    %2820 = vmatprep.subr.bf16.mxu0 %v2609
    %2821 = vmatpush2.bf16.msra.mxu0 %v2608
    %2822 = vmatprep.subr.bf16.mxu0 %v2607
    %2823 = vmatpush2.bf16.msra.mxu0 %v2606
    %2824 = vmatprep.subr.bf16.mxu0 %v2605
    %2825 = vmatpush2.bf16.msra.mxu0 %v2604
    %2826 = vmatprep.subr.bf16.mxu0 %v2603
    %2827 = vmatpush2.bf16.msra.mxu0 %v2602
    %2828 = vmatprep.mubr.bf16.mxu0 %v33
    %2829 = vmatmul.mubr.bf16.gmra.mxu0 %v32
    %v2830 = vpop.f32.mrf.mxu0
    %v2831 = vadd.f32 %v2790, %v2830
    %v2832 = vpop.f32.mrf.mxu0
    %v2833 = vadd.f32 %v2792, %v2832
    %v2834 = vpop.f32.mrf.mxu0
    %v2835 = vpop.f32.mrf.mxu0
    %2836 = vdwg.mxu0
    %v2837 = vmax.f32 %v2135, %v2831
    %v2838 = vmax.f32 %v2136, %v2833
    %v2839 = vlaneseq
    %v2840 = vshrl.u32 %v2839, 7
    %v2841 = vsub.s32 0, %v2840
    %v2842 = vrot.slane %v19, %v2841
    %v2843 = vlaneseq
    %v2844 = vshrl.u32 %v2843, 7
    %v2845 = vsub.s32 0, %v2844
    %v2846 = vrot.slane %v20, %v2845
    %v2847 = vadd.f32 %v2837, %v2842
    %v2848 = vadd.f32 %v2838, %v2846
    %v2849 = vmax.f32 %v2847, 0.0
    %v2850 = vmax.f32 %v2848, 0.0
    %v2851 = vpack.c.bf16 %v2849, %v2849
    %v2852 = vpack.c.bf16 %v2850, %v2850
    %v2853 = vld [vmem:[%s2] sm:$0xf]
    %v2854 = vld [vmem:[%s2 + $0x4] sm:$0xf]
    %v2855 = vld [vmem:[%s2 + $0x8] sm:$0xf]
    %v2856 = vld [vmem:[%s2 + $0xc] sm:$0xf]
    %v2857 = vld [vmem:[%s2 + $0x10] sm:$0xf]
    %v2858 = vld [vmem:[%s2 + $0x14] sm:$0xf]
    %v2859 = vld [vmem:[%s2 + $0x18] sm:$0xf]
    %v2860 = vld [vmem:[%s2 + $0x1c] sm:$0xf]
    %v2861 = vld [vmem:[%s2 + $0x20] sm:$0xf]
    %v2862 = vld [vmem:[%s2 + $0x24] sm:$0xf]
    %v2863 = vld [vmem:[%s2 + $0x28] sm:$0xf]
    %v2864 = vld [vmem:[%s2 + $0x2c] sm:$0xf]
    %v2865 = vld [vmem:[%s2 + $0x30] sm:$0xf]
    %v2866 = vld [vmem:[%s2 + $0x34] sm:$0xf]
    %v2867 = vld [vmem:[%s2 + $0x38] sm:$0xf]
    %v2868 = vld [vmem:[%s2 + $0x3c] sm:$0xf]
    %v2869 = vld [vmem:[%s2 + $0x40] sm:$0xf]
    %v2870 = vld [vmem:[%s2 + $0x44] sm:$0xf]
    %v2871 = vld [vmem:[%s2 + $0x48] sm:$0xf]
    %v2872 = vld [vmem:[%s2 + $0x4c] sm:$0xf]
    %v2873 = vld [vmem:[%s2 + $0x50] sm:$0xf]
    %v2874 = vld [vmem:[%s2 + $0x54] sm:$0xf]
    %v2875 = vld [vmem:[%s2 + $0x58] sm:$0xf]
    %v2876 = vld [vmem:[%s2 + $0x5c] sm:$0xf]
    %v2877 = vld [vmem:[%s2 + $0x60] sm:$0x3]
    %v2903 = vunpack.c.l.b16 %v2853
    %v2904 = vunpack.c.l.b16 %v2854
    %v2905 = vunpack.c.l.b16 %v2855
    %v2906 = vunpack.c.l.b16 %v2856
    %v2907 = vunpack.c.l.b16 %v2857
    %v2908 = vunpack.c.l.b16 %v2858
    %v2909 = vunpack.c.l.b16 %v2859
    %v2910 = vunpack.c.l.b16 %v2860
    %v2911 = vunpack.c.l.b16 %v2861
    %v2912 = vunpack.c.l.b16 %v2862
    %v2913 = vunpack.c.l.b16 %v2863
    %v2914 = vunpack.c.l.b16 %v2864
    %v2915 = vunpack.c.l.b16 %v2865
    %v2916 = vunpack.c.l.b16 %v2866
    %v2917 = vunpack.c.l.b16 %v2867
    %v2918 = vunpack.c.l.b16 %v2868
    %v2919 = vunpack.c.l.b16 %v2869
    %v2920 = vunpack.c.l.b16 %v2870
    %v2921 = vunpack.c.l.b16 %v2871
    %v2922 = vunpack.c.l.b16 %v2872
    %v2923 = vunpack.c.l.b16 %v2873
    %v2924 = vunpack.c.l.b16 %v2874
    %v2925 = vunpack.c.l.b16 %v2875
    %v2926 = vunpack.c.l.b16 %v2876
    %v2927 = vunpack.c.l.b16 %v2877
    %v2928 = vpack.c.b16 %v2904, %v2903
    %v2929 = vpack.c.b16 %v2906, %v2905
    %v2930 = vpack.c.b16 %v2908, %v2907
    %v2931 = vpack.c.b16 %v2910, %v2909
    %v2932 = vpack.c.b16 %v2912, %v2911
    %v2933 = vpack.c.b16 %v2914, %v2913
    %v2934 = vpack.c.b16 %v2916, %v2915
    %v2935 = vpack.c.b16 %v2918, %v2917
    %v2936 = vpack.c.b16 %v2920, %v2919
    %v2937 = vpack.c.b16 %v2922, %v2921
    %v2938 = vpack.c.b16 %v2924, %v2923
    %v2939 = vpack.c.b16 %v2926, %v2925
    %v2940 = vpack.c.b16 %v2927, %v2927
    %vm2953 = vcmask 556032
    %v2955 = vsel %vm2953, %v2852, 0
    %vm2957 = vcmask 1041408
    %v2959 = vsel %vm2957, %v2940, 0
    %2961 = vmatprep.subr.bf16.mxu0 0
    %2962 = vmatpush1.bf16.msra.mxu0 %v2935
    %2963 = vmatprep.subr.bf16.mxu0 0
    %2964 = vmatpush1.bf16.msra.mxu0 %v2934
    %2965 = vmatprep.subr.bf16.mxu0 0
    %2966 = vmatpush1.bf16.msra.mxu0 %v2933
    %2967 = vmatprep.subr.bf16.mxu0 0
    %2968 = vmatpush1.bf16.msra.mxu0 %v2932
    %2969 = vmatprep.subr.bf16.mxu0 0
    %2970 = vmatpush1.bf16.msra.mxu0 %v2931
    %2971 = vmatprep.subr.bf16.mxu0 0
    %2972 = vmatpush1.bf16.msra.mxu0 %v2930
    %2973 = vmatprep.subr.bf16.mxu0 0
    %2974 = vmatpush1.bf16.msra.mxu0 %v2929
    %2975 = vmatprep.subr.bf16.mxu0 0
    %2976 = vmatpush1.bf16.msra.mxu0 %v2928
    %2977 = vmatprep.subr.bf16.mxu0 0
    %2978 = vmatpush2.bf16.msra.mxu0 0
    %2979 = vmatprep.subr.bf16.mxu0 0
    %2980 = vmatpush2.bf16.msra.mxu0 0
    %2981 = vmatprep.subr.bf16.mxu0 0
    %2982 = vmatpush2.bf16.msra.mxu0 0
    %2983 = vmatprep.subr.bf16.mxu0 0
    %2984 = vmatpush2.bf16.msra.mxu0 %v2959
    %2985 = vmatprep.subr.bf16.mxu0 0
    %2986 = vmatpush2.bf16.msra.mxu0 %v2939
    %2987 = vmatprep.subr.bf16.mxu0 0
    %2988 = vmatpush2.bf16.msra.mxu0 %v2938
    %2989 = vmatprep.subr.bf16.mxu0 0
    %2990 = vmatpush2.bf16.msra.mxu0 %v2937
    %2991 = vmatprep.subr.bf16.mxu0 0
    %2992 = vmatpush2.bf16.msra.mxu0 %v2936
    %2993 = vmatprep.mubr.bf16.mxu0 %v2955
    %2994 = vmatmul.mubr.bf16.gmra.mxu0 %v2851
    %v2995 = vpop.f32.mrf.mxu0
    %v2996 = vadd.f32 0.0, %v2995
    %v2997 = vpop.f32.mrf.mxu0
    %v2998 = vpop.f32.mrf.mxu0
    %v2999 = vpop.f32.mrf.mxu0
    %3000 = vdwg.mxu0
    %s3001 = scalar_lea.vmem %s2, 100
    %v3002 = vld [vmem:[%s3001] sm:$0xf]
    %v3003 = vld [vmem:[%s3001 + $0x4] sm:$0xf]
    %v3004 = vld [vmem:[%s3001 + $0x8] sm:$0xf]
    %v3005 = vld [vmem:[%s3001 + $0xc] sm:$0xf]
    %v3006 = vld [vmem:[%s3001 + $0x10] sm:$0xf]
    %v3007 = vld [vmem:[%s3001 + $0x14] sm:$0xf]
    %v3008 = vld [vmem:[%s3001 + $0x18] sm:$0xf]
    %v3009 = vld [vmem:[%s3001 + $0x1c] sm:$0xf]
    %v3010 = vld [vmem:[%s3001 + $0x20] sm:$0xf]
    %v3011 = vld [vmem:[%s3001 + $0x24] sm:$0xf]
    %v3012 = vld [vmem:[%s3001 + $0x28] sm:$0xf]
    %v3013 = vld [vmem:[%s3001 + $0x2c] sm:$0xf]
    %v3014 = vld [vmem:[%s3001 + $0x30] sm:$0xf]
    %v3015 = vld [vmem:[%s3001 + $0x34] sm:$0xf]
    %v3016 = vld [vmem:[%s3001 + $0x38] sm:$0xf]
    %v3017 = vld [vmem:[%s3001 + $0x3c] sm:$0xf]
    %v3018 = vld [vmem:[%s3001 + $0x40] sm:$0xf]
    %v3019 = vld [vmem:[%s3001 + $0x44] sm:$0xf]
    %v3020 = vld [vmem:[%s3001 + $0x48] sm:$0xf]
    %v3021 = vld [vmem:[%s3001 + $0x4c] sm:$0xf]
    %v3022 = vld [vmem:[%s3001 + $0x50] sm:$0xf]
    %v3023 = vld [vmem:[%s3001 + $0x54] sm:$0xf]
    %v3024 = vld [vmem:[%s3001 + $0x58] sm:$0xf]
    %v3025 = vld [vmem:[%s3001 + $0x5c] sm:$0xf]
    %v3026 = vld [vmem:[%s3001 + $0x60] sm:$0x3]
    %v3052 = vunpack.c.l.b16 %v3002
    %v3053 = vunpack.c.l.b16 %v3003
    %v3054 = vunpack.c.l.b16 %v3004
    %v3055 = vunpack.c.l.b16 %v3005
    %v3056 = vunpack.c.l.b16 %v3006
    %v3057 = vunpack.c.l.b16 %v3007
    %v3058 = vunpack.c.l.b16 %v3008
    %v3059 = vunpack.c.l.b16 %v3009
    %v3060 = vunpack.c.l.b16 %v3010
    %v3061 = vunpack.c.l.b16 %v3011
    %v3062 = vunpack.c.l.b16 %v3012
    %v3063 = vunpack.c.l.b16 %v3013
    %v3064 = vunpack.c.l.b16 %v3014
    %v3065 = vunpack.c.l.b16 %v3015
    %v3066 = vunpack.c.l.b16 %v3016
    %v3067 = vunpack.c.l.b16 %v3017
    %v3068 = vunpack.c.l.b16 %v3018
    %v3069 = vunpack.c.l.b16 %v3019
    %v3070 = vunpack.c.l.b16 %v3020
    %v3071 = vunpack.c.l.b16 %v3021
    %v3072 = vunpack.c.l.b16 %v3022
    %v3073 = vunpack.c.l.b16 %v3023
    %v3074 = vunpack.c.l.b16 %v3024
    %v3075 = vunpack.c.l.b16 %v3025
    %v3076 = vunpack.c.l.b16 %v3026
    %v3077 = vpack.c.b16 %v3053, %v3052
    %v3078 = vpack.c.b16 %v3055, %v3054
    %v3079 = vpack.c.b16 %v3057, %v3056
    %v3080 = vpack.c.b16 %v3059, %v3058
    %v3081 = vpack.c.b16 %v3061, %v3060
    %v3082 = vpack.c.b16 %v3063, %v3062
    %v3083 = vpack.c.b16 %v3065, %v3064
    %v3084 = vpack.c.b16 %v3067, %v3066
    %v3085 = vpack.c.b16 %v3069, %v3068
    %v3086 = vpack.c.b16 %v3071, %v3070
    %v3087 = vpack.c.b16 %v3073, %v3072
    %v3088 = vpack.c.b16 %v3075, %v3074
    %v3089 = vpack.c.b16 %v3076, %v3076
    %v3103 = vsel %vm2957, %v3089, 0
    %3105 = vmatprep.subr.bf16.mxu0 0
    %3106 = vmatpush1.bf16.msra.mxu0 %v3084
    %3107 = vmatprep.subr.bf16.mxu0 0
    %3108 = vmatpush1.bf16.msra.mxu0 %v3083
    %3109 = vmatprep.subr.bf16.mxu0 0
    %3110 = vmatpush1.bf16.msra.mxu0 %v3082
    %3111 = vmatprep.subr.bf16.mxu0 0
    %3112 = vmatpush1.bf16.msra.mxu0 %v3081
    %3113 = vmatprep.subr.bf16.mxu0 0
    %3114 = vmatpush1.bf16.msra.mxu0 %v3080
    %3115 = vmatprep.subr.bf16.mxu0 0
    %3116 = vmatpush1.bf16.msra.mxu0 %v3079
    %3117 = vmatprep.subr.bf16.mxu0 0
    %3118 = vmatpush1.bf16.msra.mxu0 %v3078
    %3119 = vmatprep.subr.bf16.mxu0 0
    %3120 = vmatpush1.bf16.msra.mxu0 %v3077
    %3121 = vmatprep.subr.bf16.mxu0 0
    %3122 = vmatpush2.bf16.msra.mxu0 0
    %3123 = vmatprep.subr.bf16.mxu0 0
    %3124 = vmatpush2.bf16.msra.mxu0 0
    %3125 = vmatprep.subr.bf16.mxu0 0
    %3126 = vmatpush2.bf16.msra.mxu0 0
    %3127 = vmatprep.subr.bf16.mxu0 0
    %3128 = vmatpush2.bf16.msra.mxu0 %v3103
    %3129 = vmatprep.subr.bf16.mxu0 0
    %3130 = vmatpush2.bf16.msra.mxu0 %v3088
    %3131 = vmatprep.subr.bf16.mxu0 0
    %3132 = vmatpush2.bf16.msra.mxu0 %v3087
    %3133 = vmatprep.subr.bf16.mxu0 0
    %3134 = vmatpush2.bf16.msra.mxu0 %v3086
    %3135 = vmatprep.subr.bf16.mxu0 0
    %3136 = vmatpush2.bf16.msra.mxu0 %v3085
    %3137 = vmatprep.mubr.bf16.mxu0 %v2955
    %3138 = vmatmul.mubr.bf16.gmra.mxu0 %v2851
    %v3139 = vpop.f32.mrf.mxu0
    %v3140 = vadd.f32 0.0, %v3139
    %v3141 = vpop.f32.mrf.mxu0
    %v3142 = vpop.f32.mrf.mxu0
    %v3143 = vpop.f32.mrf.mxu0
    %3144 = vdwg.mxu0
    %v3145 = vmax.f32 %v2996, %v3140
    %s3146 = scalar_lea.vmem %s2, 200
    %v3147 = vld [vmem:[%s3146] sm:$0xf]
    %v3148 = vld [vmem:[%s3146 + $0x4] sm:$0xf]
    %v3149 = vld [vmem:[%s3146 + $0x8] sm:$0xf]
    %v3150 = vld [vmem:[%s3146 + $0xc] sm:$0xf]
    %v3151 = vld [vmem:[%s3146 + $0x10] sm:$0xf]
    %v3152 = vld [vmem:[%s3146 + $0x14] sm:$0xf]
    %v3153 = vld [vmem:[%s3146 + $0x18] sm:$0xf]
    %v3154 = vld [vmem:[%s3146 + $0x1c] sm:$0xf]
    %v3155 = vld [vmem:[%s3146 + $0x20] sm:$0xf]
    %v3156 = vld [vmem:[%s3146 + $0x24] sm:$0xf]
    %v3157 = vld [vmem:[%s3146 + $0x28] sm:$0xf]
    %v3158 = vld [vmem:[%s3146 + $0x2c] sm:$0xf]
    %v3159 = vld [vmem:[%s3146 + $0x30] sm:$0xf]
    %v3160 = vld [vmem:[%s3146 + $0x34] sm:$0xf]
    %v3161 = vld [vmem:[%s3146 + $0x38] sm:$0xf]
    %v3162 = vld [vmem:[%s3146 + $0x3c] sm:$0xf]
    %v3163 = vld [vmem:[%s3146 + $0x40] sm:$0xf]
    %v3164 = vld [vmem:[%s3146 + $0x44] sm:$0xf]
    %v3165 = vld [vmem:[%s3146 + $0x48] sm:$0xf]
    %v3166 = vld [vmem:[%s3146 + $0x4c] sm:$0xf]
    %v3167 = vld [vmem:[%s3146 + $0x50] sm:$0xf]
    %v3168 = vld [vmem:[%s3146 + $0x54] sm:$0xf]
    %v3169 = vld [vmem:[%s3146 + $0x58] sm:$0xf]
    %v3170 = vld [vmem:[%s3146 + $0x5c] sm:$0xf]
    %v3171 = vld [vmem:[%s3146 + $0x60] sm:$0x3]
    %v3197 = vunpack.c.l.b16 %v3147
    %v3198 = vunpack.c.l.b16 %v3148
    %v3199 = vunpack.c.l.b16 %v3149
    %v3200 = vunpack.c.l.b16 %v3150
    %v3201 = vunpack.c.l.b16 %v3151
    %v3202 = vunpack.c.l.b16 %v3152
    %v3203 = vunpack.c.l.b16 %v3153
    %v3204 = vunpack.c.l.b16 %v3154
    %v3205 = vunpack.c.l.b16 %v3155
    %v3206 = vunpack.c.l.b16 %v3156
    %v3207 = vunpack.c.l.b16 %v3157
    %v3208 = vunpack.c.l.b16 %v3158
    %v3209 = vunpack.c.l.b16 %v3159
    %v3210 = vunpack.c.l.b16 %v3160
    %v3211 = vunpack.c.l.b16 %v3161
    %v3212 = vunpack.c.l.b16 %v3162
    %v3213 = vunpack.c.l.b16 %v3163
    %v3214 = vunpack.c.l.b16 %v3164
    %v3215 = vunpack.c.l.b16 %v3165
    %v3216 = vunpack.c.l.b16 %v3166
    %v3217 = vunpack.c.l.b16 %v3167
    %v3218 = vunpack.c.l.b16 %v3168
    %v3219 = vunpack.c.l.b16 %v3169
    %v3220 = vunpack.c.l.b16 %v3170
    %v3221 = vunpack.c.l.b16 %v3171
    %v3222 = vpack.c.b16 %v3198, %v3197
    %v3223 = vpack.c.b16 %v3200, %v3199
    %v3224 = vpack.c.b16 %v3202, %v3201
    %v3225 = vpack.c.b16 %v3204, %v3203
    %v3226 = vpack.c.b16 %v3206, %v3205
    %v3227 = vpack.c.b16 %v3208, %v3207
    %v3228 = vpack.c.b16 %v3210, %v3209
    %v3229 = vpack.c.b16 %v3212, %v3211
    %v3230 = vpack.c.b16 %v3214, %v3213
    %v3231 = vpack.c.b16 %v3216, %v3215
    %v3232 = vpack.c.b16 %v3218, %v3217
    %v3233 = vpack.c.b16 %v3220, %v3219
    %v3234 = vpack.c.b16 %v3221, %v3221
    %v3248 = vsel %vm2957, %v3234, 0
    %3250 = vmatprep.subr.bf16.mxu0 0
    %3251 = vmatpush1.bf16.msra.mxu0 %v3229
    %3252 = vmatprep.subr.bf16.mxu0 0
    %3253 = vmatpush1.bf16.msra.mxu0 %v3228
    %3254 = vmatprep.subr.bf16.mxu0 0
    %3255 = vmatpush1.bf16.msra.mxu0 %v3227
    %3256 = vmatprep.subr.bf16.mxu0 0
    %3257 = vmatpush1.bf16.msra.mxu0 %v3226
    %3258 = vmatprep.subr.bf16.mxu0 0
    %3259 = vmatpush1.bf16.msra.mxu0 %v3225
    %3260 = vmatprep.subr.bf16.mxu0 0
    %3261 = vmatpush1.bf16.msra.mxu0 %v3224
    %3262 = vmatprep.subr.bf16.mxu0 0
    %3263 = vmatpush1.bf16.msra.mxu0 %v3223
    %3264 = vmatprep.subr.bf16.mxu0 0
    %3265 = vmatpush1.bf16.msra.mxu0 %v3222
    %3266 = vmatprep.subr.bf16.mxu0 0
    %3267 = vmatpush2.bf16.msra.mxu0 0
    %3268 = vmatprep.subr.bf16.mxu0 0
    %3269 = vmatpush2.bf16.msra.mxu0 0
    %3270 = vmatprep.subr.bf16.mxu0 0
    %3271 = vmatpush2.bf16.msra.mxu0 0
    %3272 = vmatprep.subr.bf16.mxu0 0
    %3273 = vmatpush2.bf16.msra.mxu0 %v3248
    %3274 = vmatprep.subr.bf16.mxu0 0
    %3275 = vmatpush2.bf16.msra.mxu0 %v3233
    %3276 = vmatprep.subr.bf16.mxu0 0
    %3277 = vmatpush2.bf16.msra.mxu0 %v3232
    %3278 = vmatprep.subr.bf16.mxu0 0
    %3279 = vmatpush2.bf16.msra.mxu0 %v3231
    %3280 = vmatprep.subr.bf16.mxu0 0
    %3281 = vmatpush2.bf16.msra.mxu0 %v3230
    %3282 = vmatprep.mubr.bf16.mxu0 %v2955
    %3283 = vmatmul.mubr.bf16.gmra.mxu0 %v2851
    %v3284 = vpop.f32.mrf.mxu0
    %v3285 = vadd.f32 0.0, %v3284
    %v3286 = vpop.f32.mrf.mxu0
    %v3287 = vpop.f32.mrf.mxu0
    %v3288 = vpop.f32.mrf.mxu0
    %3289 = vdwg.mxu0
    %v3290 = vmax.f32 %v3145, %v3285
    %s3291 = scalar_lea.vmem %s2, 300
    %v3292 = vld [vmem:[%s3291] sm:$0xf]
    %v3293 = vld [vmem:[%s3291 + $0x4] sm:$0xf]
    %v3294 = vld [vmem:[%s3291 + $0x8] sm:$0xf]
    %v3295 = vld [vmem:[%s3291 + $0xc] sm:$0xf]
    %v3296 = vld [vmem:[%s3291 + $0x10] sm:$0xf]
    %v3297 = vld [vmem:[%s3291 + $0x14] sm:$0xf]
    %v3298 = vld [vmem:[%s3291 + $0x18] sm:$0xf]
    %v3299 = vld [vmem:[%s3291 + $0x1c] sm:$0xf]
    %v3300 = vld [vmem:[%s3291 + $0x20] sm:$0xf]
    %v3301 = vld [vmem:[%s3291 + $0x24] sm:$0xf]
    %v3302 = vld [vmem:[%s3291 + $0x28] sm:$0xf]
    %v3303 = vld [vmem:[%s3291 + $0x2c] sm:$0xf]
    %v3304 = vld [vmem:[%s3291 + $0x30] sm:$0xf]
    %v3305 = vld [vmem:[%s3291 + $0x34] sm:$0xf]
    %v3306 = vld [vmem:[%s3291 + $0x38] sm:$0xf]
    %v3307 = vld [vmem:[%s3291 + $0x3c] sm:$0xf]
    %v3308 = vld [vmem:[%s3291 + $0x40] sm:$0xf]
    %v3309 = vld [vmem:[%s3291 + $0x44] sm:$0xf]
    %v3310 = vld [vmem:[%s3291 + $0x48] sm:$0xf]
    %v3311 = vld [vmem:[%s3291 + $0x4c] sm:$0xf]
    %v3312 = vld [vmem:[%s3291 + $0x50] sm:$0xf]
    %v3313 = vld [vmem:[%s3291 + $0x54] sm:$0xf]
    %v3314 = vld [vmem:[%s3291 + $0x58] sm:$0xf]
    %v3315 = vld [vmem:[%s3291 + $0x5c] sm:$0xf]
    %v3316 = vld [vmem:[%s3291 + $0x60] sm:$0x3]
    %v3342 = vunpack.c.l.b16 %v3292
    %v3343 = vunpack.c.l.b16 %v3293
    %v3344 = vunpack.c.l.b16 %v3294
    %v3345 = vunpack.c.l.b16 %v3295
    %v3346 = vunpack.c.l.b16 %v3296
    %v3347 = vunpack.c.l.b16 %v3297
    %v3348 = vunpack.c.l.b16 %v3298
    %v3349 = vunpack.c.l.b16 %v3299
    %v3350 = vunpack.c.l.b16 %v3300
    %v3351 = vunpack.c.l.b16 %v3301
    %v3352 = vunpack.c.l.b16 %v3302
    %v3353 = vunpack.c.l.b16 %v3303
    %v3354 = vunpack.c.l.b16 %v3304
    %v3355 = vunpack.c.l.b16 %v3305
    %v3356 = vunpack.c.l.b16 %v3306
    %v3357 = vunpack.c.l.b16 %v3307
    %v3358 = vunpack.c.l.b16 %v3308
    %v3359 = vunpack.c.l.b16 %v3309
    %v3360 = vunpack.c.l.b16 %v3310
    %v3361 = vunpack.c.l.b16 %v3311
    %v3362 = vunpack.c.l.b16 %v3312
    %v3363 = vunpack.c.l.b16 %v3313
    %v3364 = vunpack.c.l.b16 %v3314
    %v3365 = vunpack.c.l.b16 %v3315
    %v3366 = vunpack.c.l.b16 %v3316
    %v3367 = vpack.c.b16 %v3343, %v3342
    %v3368 = vpack.c.b16 %v3345, %v3344
    %v3369 = vpack.c.b16 %v3347, %v3346
    %v3370 = vpack.c.b16 %v3349, %v3348
    %v3371 = vpack.c.b16 %v3351, %v3350
    %v3372 = vpack.c.b16 %v3353, %v3352
    %v3373 = vpack.c.b16 %v3355, %v3354
    %v3374 = vpack.c.b16 %v3357, %v3356
    %v3375 = vpack.c.b16 %v3359, %v3358
    %v3376 = vpack.c.b16 %v3361, %v3360
    %v3377 = vpack.c.b16 %v3363, %v3362
    %v3378 = vpack.c.b16 %v3365, %v3364
    %v3379 = vpack.c.b16 %v3366, %v3366
    %v3393 = vsel %vm2957, %v3379, 0
    %3395 = vmatprep.subr.bf16.mxu0 0
    %3396 = vmatpush1.bf16.msra.mxu0 %v3374
    %3397 = vmatprep.subr.bf16.mxu0 0
    %3398 = vmatpush1.bf16.msra.mxu0 %v3373
    %3399 = vmatprep.subr.bf16.mxu0 0
    %3400 = vmatpush1.bf16.msra.mxu0 %v3372
    %3401 = vmatprep.subr.bf16.mxu0 0
    %3402 = vmatpush1.bf16.msra.mxu0 %v3371
    %3403 = vmatprep.subr.bf16.mxu0 0
    %3404 = vmatpush1.bf16.msra.mxu0 %v3370
    %3405 = vmatprep.subr.bf16.mxu0 0
    %3406 = vmatpush1.bf16.msra.mxu0 %v3369
    %3407 = vmatprep.subr.bf16.mxu0 0
    %3408 = vmatpush1.bf16.msra.mxu0 %v3368
    %3409 = vmatprep.subr.bf16.mxu0 0
    %3410 = vmatpush1.bf16.msra.mxu0 %v3367
    %3411 = vmatprep.subr.bf16.mxu0 0
    %3412 = vmatpush2.bf16.msra.mxu0 0
    %3413 = vmatprep.subr.bf16.mxu0 0
    %3414 = vmatpush2.bf16.msra.mxu0 0
    %3415 = vmatprep.subr.bf16.mxu0 0
    %3416 = vmatpush2.bf16.msra.mxu0 0
    %3417 = vmatprep.subr.bf16.mxu0 0
    %3418 = vmatpush2.bf16.msra.mxu0 %v3393
    %3419 = vmatprep.subr.bf16.mxu0 0
    %3420 = vmatpush2.bf16.msra.mxu0 %v3378
    %3421 = vmatprep.subr.bf16.mxu0 0
    %3422 = vmatpush2.bf16.msra.mxu0 %v3377
    %3423 = vmatprep.subr.bf16.mxu0 0
    %3424 = vmatpush2.bf16.msra.mxu0 %v3376
    %3425 = vmatprep.subr.bf16.mxu0 0
    %3426 = vmatpush2.bf16.msra.mxu0 %v3375
    %3427 = vmatprep.mubr.bf16.mxu0 %v2955
    %3428 = vmatmul.mubr.bf16.gmra.mxu0 %v2851
    %v3429 = vpop.f32.mrf.mxu0
    %v3430 = vadd.f32 0.0, %v3429
    %v3431 = vpop.f32.mrf.mxu0
    %v3432 = vpop.f32.mrf.mxu0
    %v3433 = vpop.f32.mrf.mxu0
    %3434 = vdwg.mxu0
    %v3435 = vmax.f32 %v3290, %v3430
    %3437 = vrot.lane.b32.xlu0 %v2846, 60
    %v3438 = vpop.permute.xlu0 %3437
    %v3440 = vadd.f32 %v3435, %v3438
    %v3441 = vmax.f32 %v3440, 0.0
    %3444 = vrot.lane.b32.xlu0 %v20, 44
    %v3445 = vpop.permute.xlu0 %3444
    %3446 = vrot.lane.b32.xlu0 %v21, 44
    %v3447 = vpop.permute.xlu0 %3446
    %3450 = vrot.lane.b32.xlu0 %v2846, 34
    %v3451 = vpop.permute.xlu0 %3450
    %vm3453 = vcmask 130048
    %v3455 = vsel %vm3453, %v3441, 0
    %3457 = vmatprep.subr.mxu0 0.0
    %3458 = vmatpush1.msra.mxu0 0.0
    %3459 = vmatprep.subr.mxu0 0.0
    %3460 = vmatpush1.msra.mxu0 0.0
    %3461 = vmatprep.subr.mxu0 0.0
    %3462 = vmatpush1.msra.mxu0 0.0
    %3463 = vmatprep.subr.mxu0 0.0
    %3464 = vmatpush1.msra.mxu0 0.0
    %3465 = vmatprep.subr.mxu0 0.0
    %3466 = vmatpush1.msra.mxu0 0.0
    %3467 = vmatprep.subr.mxu0 0.0
    %3468 = vmatpush1.msra.mxu0 0.0
    %3469 = vmatprep.subr.mxu0 0.0
    %3470 = vmatpush1.msra.mxu0 0.0
    %3471 = vmatprep.subr.mxu0 0.0
    %3472 = vmatpush1.msra.mxu0 0.0
    %3473 = vmatprep.subr.mxu0 0.0
    %3474 = vmatpush1.msra.mxu0 0.0
    %3475 = vmatprep.subr.mxu0 0.0
    %3476 = vmatpush1.msra.mxu0 0.0
    %3477 = vmatprep.subr.mxu0 0.0
    %3478 = vmatpush1.msra.mxu0 0.0
    %3479 = vmatprep.subr.mxu0 0.0
    %3480 = vmatpush1.msra.mxu0 0.0
    %3481 = vmatprep.subr.mxu0 0.0
    %3482 = vmatpush1.msra.mxu0 0.0
    %3483 = vmatprep.subr.mxu0 0.0
    %3484 = vmatpush1.msra.mxu0 0.0
    %3485 = vmatprep.subr.mxu0 0.0
    %3486 = vmatpush1.msra.mxu0 %v3447
    %3487 = vmatprep.subr.mxu0 0.0
    %3488 = vmatpush1.msra.mxu0 %v3445
    %3489 = vmatprep.subr.mxu0 0.0
    %3490 = vmatpush2.msra.mxu0 0.0
    %3491 = vmatprep.subr.mxu0 0.0
    %3492 = vmatpush2.msra.mxu0 0.0
    %3493 = vmatprep.subr.mxu0 0.0
    %3494 = vmatpush2.msra.mxu0 0.0
    %3495 = vmatprep.subr.mxu0 0.0
    %3496 = vmatpush2.msra.mxu0 0.0
    %3497 = vmatprep.subr.mxu0 0.0
    %3498 = vmatpush2.msra.mxu0 0.0
    %3499 = vmatprep.subr.mxu0 0.0
    %3500 = vmatpush2.msra.mxu0 0.0
    %3501 = vmatprep.subr.mxu0 0.0
    %3502 = vmatpush2.msra.mxu0 0.0
    %3503 = vmatprep.subr.mxu0 0.0
    %3504 = vmatpush2.msra.mxu0 0.0
    %3505 = vmatprep.subr.mxu0 0.0
    %3506 = vmatpush2.msra.mxu0 0.0
    %3507 = vmatprep.subr.mxu0 0.0
    %3508 = vmatpush2.msra.mxu0 0.0
    %3509 = vmatprep.subr.mxu0 0.0
    %3510 = vmatpush2.msra.mxu0 0.0
    %3511 = vmatprep.subr.mxu0 0.0
    %3512 = vmatpush2.msra.mxu0 0.0
    %3513 = vmatprep.subr.mxu0 0.0
    %3514 = vmatpush2.msra.mxu0 0.0
    %3515 = vmatprep.subr.mxu0 0.0
    %3516 = vmatpush2.msra.mxu0 0.0
    %3517 = vmatprep.subr.mxu0 0.0
    %3518 = vmatpush2.msra.mxu0 0.0
    %3519 = vmatprep.subr.mxu0 0.0
    %3520 = vmatpush2.msra.mxu0 0.0
    %3521 = vmatprep.mubr.f32.mxu0 0.0
    %3522 = vmatmul.mubr.f32.gmra.mxu0 %v3455
    %v3523 = vpop.f32.mrf.mxu0
    %v3524 = vadd.f32 %v3451, %v3523
    %v3525 = vpop.f32.mrf.mxu0
    %3526 = vdwg.mxu0
    %vm3527 = vcmask 80896
    %3528 = vst.msk [vmem:[#allocation2] sm:$0xff] %vm3527, %v3524
    // Predicated region
    $region18: #{tpu_custom_call.1} parent=1 // pred_check
      _
    $region19: #{tpu_custom_call.1} parent=1 // pred_check_branch
      %3530 = sbr.rel (0) target = $region21
    $region20: #{tpu_custom_call.1} parent=1 // pred_region
      %s3532 = ssub.s32 128, 128
      %3533 = vsyncadd [#allocation3], %s3532
      %s3535 = sshll.u32 [#allocation2], 4
      %s3536 = int_to_ptr.vmem [resolvable:$true] %s3535
      %3538 = dma.vmem_to_hbm [thread:$0]  %s3536, 128, %s4, [#allocation3]
    $region21: #{tpu_custom_call.1} parent=1 // pred_fallthru
      _
    // Predicated region
    $region22: #{tpu_custom_call.1} parent=1 // pred_check
      _
    $region23: #{tpu_custom_call.1} parent=1 // pred_check_branch
      %3540 = sbr.rel (0) target = $region25
    $region24: #{tpu_custom_call.1} parent=1 // pred_region
      %3541 = dma.done [#allocation3], 128
    $region25: #{tpu_custom_call.1} parent=1 // pred_fallthru
      _
    %3542 = vsyncpa [#allocation3], 1

</llo_original>
